<compile_context>
chip_gen: v6e
topology: v6e:2x2x1
jax: 0.10.0
libtpu: 0.0.40
codegen_flags: <defaults>
</compile_context>

<pallas_src>
import jax
import jax.numpy as jnp
from jax import lax
from jax.experimental import pallas as pl
from jax.experimental.pallas import tpu as pltpu


def _vit_weight_kernel(x_ref, w1_ref, b1_ref, w2_ref, b2_ref, w3_ref, b3_ref, o_ref):
    hp = lax.Precision.HIGHEST
    x = x_ref[...]  # (TB, in_features) -- native layout, no wrapper copy

    # fc1 + relu : contract (d1, in) with (TB, in) over the feature axis
    #   -> (d1, TB); the in-kernel transpose of x rides the XLU slot.
    h = lax.dot_general(w1_ref[...], x, (((1,), (1,)), ((), ())),
                        preferred_element_type=jnp.float32, precision=hp)
    h = jnp.maximum(h + b1_ref[...], 0.0)

    # fc2 + relu : (d2, d1) @ (d1, TB) -> (d2, TB)
    h = jnp.dot(w2_ref[...], h, preferred_element_type=jnp.float32, precision=hp)
    h = jnp.maximum(h + b2_ref[...], 0.0)

    # fc3 + relu : (num_models, d2) @ (d2, TB) -> (num_models, TB)
    h3 = jnp.dot(w3_ref[...], h, preferred_element_type=jnp.float32, precision=hp)
    h3 = jnp.maximum(h3 + b3_ref[...], 0.0)

    if o_ref.shape[0] == 2:
        # 2-way softmax == sigmoid of the row difference: halves the EUP exp
        # count and removes the cross-sublane max/sum reductions.
        d = h3[0:1, :] - h3[1:2, :]
        p0 = 1.0 / (1.0 + jnp.exp(-d))
        o_ref[...] = jnp.concatenate([p0, 1.0 - p0], axis=0)
    else:
        # Generic softmax over the (tiny) model axis; lanes stay dense.
        m = jnp.max(h3, axis=0, keepdims=True)
        e = jnp.exp(h3 - m)
        s = jnp.sum(e, axis=0, keepdims=True)
        o_ref[...] = e * pl.reciprocal(s, approx=False)


def vit_weight_forward(x, params, *, tb=1024):
    """x: (B, in_features) f32.  Returns (probs[:, 0], probs[:, 1])."""
    w1, b1, w2, b2, w3, b3 = params  # weights (out, in); biases (out, 1)
    B, in_features = x.shape
    d1, d2, num_models = w1.shape[0], w2.shape[0], w3.shape[0]

    # Lane-aligned batch tile, as large as possible (amortizes the ~600-cycle
    # per-grid-step overhead) but >= 2 tiles whenever the batch allows so the
    # "parallel" grid axis can be split across v7x's two TensorCores.
    tb_eff = min(tb, max(128, 128 * pl.cdiv(pl.cdiv(B, 2), 128)))
    n_tiles = pl.cdiv(B, tb_eff)
    B_pad = n_tiles * tb_eff

    # No transpose copy.  Pad only when the batch is not tile-aligned; padded
    # rows flow through ReLU+sigmoid (finite) and are sliced away below.
    if B_pad != B:
        x = jnp.pad(x, ((0, B_pad - B), (0, 0)))

    # Explicit VMEM limit with headroom (double-buffered x/out blocks, live
    # intermediates, resident weights) -- matters on v5e (16 MiB default) when
    # tb is large; always <= v7x's 64 MiB physical.
    param_bytes = 4 * (w1.size + b1.size + w2.size + b2.size + w3.size + b3.size)
    work_bytes = 4 * tb_eff * (2 * in_features          # double-buffered x block
                               + 2 * num_models         # double-buffered out block
                               + 2 * (d1 + d2 + num_models))  # intermediates
    vmem_limit = int(min(64 * 1024 * 1024,
                         max(32 * 1024 * 1024, 4 * (param_bytes + work_bytes))))

    flops = 2 * B_pad * (d1 * in_features + d2 * d1 + num_models * d2)
    bytes_accessed = 4 * (x.size + w1.size + b1.size + w2.size + b2.size
                          + w3.size + b3.size + num_models * B_pad)

    out = pl.pallas_call(
        _vit_weight_kernel,
        out_shape=jax.ShapeDtypeStruct((num_models, B_pad), jnp.float32),
        grid_spec=pl.GridSpec(
            grid=(n_tiles,),
            in_specs=[
                # activations: one large batch tile per grid step (pipelined DMA)
                pl.BlockSpec((tb_eff, in_features), lambda i: (i, 0)),
                # weights / biases: same block every step -> stay VMEM-resident
                pl.BlockSpec(w1.shape, lambda i: (0, 0)),
                pl.BlockSpec(b1.shape, lambda i: (0, 0)),
                pl.BlockSpec(w2.shape, lambda i: (0, 0)),
                pl.BlockSpec(b2.shape, lambda i: (0, 0)),
                pl.BlockSpec(w3.shape, lambda i: (0, 0)),
                pl.BlockSpec(b3.shape, lambda i: (0, 0)),
            ],
            out_specs=pl.BlockSpec((num_models, tb_eff), lambda i: (0, i)),
        ),
        compiler_params=pltpu.CompilerParams(
            dimension_semantics=("parallel",),   # batch tiles are independent
            vmem_limit_bytes=vmem_limit,
        ),
        cost_estimate=pl.CostEstimate(
            flops=flops,
            transcendentals=num_models * B_pad,
            bytes_accessed=bytes_accessed,
        ),
    )(x, w1, b1, w2, b2, w3, b3)

    # Output is (num_models, B_pad): lane-dense rows; slice rows, drop padding.
    return out[0, :B], out[1, :B]


def init_params(key, in_features, num_models=2):
    """Deterministic init mimicking nn.Linear (uniform +-1/sqrt(fan_in)).
    Weights stored (out, in) -- nn.Linear native; biases stored as (out, 1)."""
    d1 = in_features // 2
    d2 = in_features // 4
    dims = [(in_features, d1), (d1, d2), (d2, num_models)]
    params = []
    for (fan_in, fan_out) in dims:
        key, kw, kb = jax.random.split(key, 3)
        bound = 1.0 / jnp.sqrt(fan_in)
        w = jax.random.uniform(kw, (fan_out, fan_in), jnp.float32, -bound, bound)
        b = jax.random.uniform(kb, (fan_out, 1), jnp.float32, -bound, bound)
        params += [w, b]
    return tuple(params)


if __name__ == "__main__":
    key = jax.random.PRNGKey(0)
    in_features = 32
    num_models = 2
    batch = 256  # -> two lane-dense batch tiles of 128: exercises the pipelined grid

    key, kx = jax.random.split(key)
    x = jax.random.normal(kx, (batch, in_features), dtype=jnp.float32)
    params = init_params(key, in_features, num_models)

    p0, p1 = vit_weight_forward(x, params)
    jax.block_until_ready((p0, p1))

    # Reference check in plain JAX (fp32-accurate matmuls to match the kernel).
    w1, b1, w2, b2, w3, b3 = params
    hp = jax.lax.Precision.HIGHEST
    h = jnp.maximum(jnp.dot(x, w1.T, precision=hp) + b1.T, 0.0)
    h = jnp.maximum(jnp.dot(h, w2.T, precision=hp) + b2.T, 0.0)
    h = jnp.maximum(jnp.dot(h, w3.T, precision=hp) + b3.T, 0.0)
    ref = jax.nn.softmax(h, axis=-1)
    assert jnp.allclose(p0, ref[:, 0], atol=1e-5)
    assert jnp.allclose(p1, ref[:, 1], atol=1e-5)

    print("KERNEL_OK")
</pallas_src>

<mosaic_0001>
module attributes {stable_mosaic.version = 11 : i64} {
  func.func @_vit_weight_kernel(%arg0: i32, %arg1: memref<128x32xf32, #tpu.memory_space<vmem>>, %arg2: memref<16x32xf32, #tpu.memory_space<vmem>>, %arg3: memref<16x1xf32, #tpu.memory_space<vmem>>, %arg4: memref<8x16xf32, #tpu.memory_space<vmem>>, %arg5: memref<8x1xf32, #tpu.memory_space<vmem>>, %arg6: memref<2x8xf32, #tpu.memory_space<vmem>>, %arg7: memref<2x1xf32, #tpu.memory_space<vmem>>, %arg8: memref<2x128xf32, #tpu.memory_space<vmem>>) attributes {dimension_semantics = [#tpu.dimension_semantics<parallel>], iteration_bounds = array<i64: 2>, scalar_prefetch = 0 : i64, scratch_operands = 0 : i64, tpu.core_type = #tpu.core_type<tc>, window_params = [{transform_indices = @transform_0, window_bounds = array<i64: 128, 32>}, {pipeline_mode = #tpu.pipeline_mode<synchronous>, transform_indices = @transform_1, window_bounds = array<i64: 16, 32>}, {pipeline_mode = #tpu.pipeline_mode<synchronous>, transform_indices = @transform_2, window_bounds = array<i64: 16, 1>}, {pipeline_mode = #tpu.pipeline_mode<synchronous>, transform_indices = @transform_3, window_bounds = array<i64: 8, 16>}, {pipeline_mode = #tpu.pipeline_mode<synchronous>, transform_indices = @transform_4, window_bounds = array<i64: 8, 1>}, {pipeline_mode = #tpu.pipeline_mode<synchronous>, transform_indices = @transform_5, window_bounds = array<i64: 2, 8>}, {pipeline_mode = #tpu.pipeline_mode<synchronous>, transform_indices = @transform_6, window_bounds = array<i64: 2, 1>}, {transform_indices = @transform_7, window_bounds = array<i64: 2, 128>}]} {
    %c0 = arith.constant 0 : index
    %c0_0 = arith.constant 0 : index
    %0 = vector.load %arg1[%c0, %c0_0] : memref<128x32xf32, #tpu.memory_space<vmem>>, vector<128x32xf32>
    %c0_1 = arith.constant 0 : index
    %c0_2 = arith.constant 0 : index
    %1 = vector.load %arg2[%c0_1, %c0_2] : memref<16x32xf32, #tpu.memory_space<vmem>>, vector<16x32xf32>
    %cst = arith.constant dense<0.000000e+00> : vector<16x128xf32>
    %2 = tpu.matmul %1, %0, %cst {dimension_numbers = #tpu.dot_dimension_numbers<[1], [1], [0], [0], [0, 0, 1, 0], [], []>, precision = #tpu.contract_precision<fp32>} : vector<16x32xf32>, vector<128x32xf32>, vector<16x128xf32> -> vector<16x128xf32>
    %c0_3 = arith.constant 0 : index
    %c0_4 = arith.constant 0 : index
    %3 = vector.load %arg3[%c0_3, %c0_4] : memref<16x1xf32, #tpu.memory_space<vmem>>, vector<16x1xf32>
    %4 = vector.broadcast %3 : vector<16x1xf32> to vector<16x128xf32>
    %5 = arith.addf %2, %4 : vector<16x128xf32>
    %cst_5 = arith.constant 0.000000e+00 : f32
    %6 = vector.broadcast %cst_5 : f32 to vector<16x128xf32>
    %7 = arith.maximumf %5, %6 : vector<16x128xf32>
    %c0_6 = arith.constant 0 : index
    %c0_7 = arith.constant 0 : index
    %8 = vector.load %arg4[%c0_6, %c0_7] : memref<8x16xf32, #tpu.memory_space<vmem>>, vector<8x16xf32>
    %cst_8 = arith.constant dense<0.000000e+00> : vector<8x128xf32>
    %9 = tpu.matmul %8, %7, %cst_8 {dimension_numbers = #tpu.dot_dimension_numbers<[1], [0], [0], [1], [0, 0, 1, 1], [], []>, precision = #tpu.contract_precision<fp32>} : vector<8x16xf32>, vector<16x128xf32>, vector<8x128xf32> -> vector<8x128xf32>
    %c0_9 = arith.constant 0 : index
    %c0_10 = arith.constant 0 : index
    %10 = vector.load %arg5[%c0_9, %c0_10] : memref<8x1xf32, #tpu.memory_space<vmem>>, vector<8x1xf32>
    %11 = vector.broadcast %10 : vector<8x1xf32> to vector<8x128xf32>
    %12 = arith.addf %9, %11 : vector<8x128xf32>
    %cst_11 = arith.constant 0.000000e+00 : f32
    %13 = vector.broadcast %cst_11 : f32 to vector<8x128xf32>
    %14 = arith.maximumf %12, %13 : vector<8x128xf32>
    %c0_12 = arith.constant 0 : index
    %c0_13 = arith.constant 0 : index
    %15 = vector.load %arg6[%c0_12, %c0_13] : memref<2x8xf32, #tpu.memory_space<vmem>>, vector<2x8xf32>
    %cst_14 = arith.constant dense<0.000000e+00> : vector<2x128xf32>
    %16 = tpu.matmul %15, %14, %cst_14 {dimension_numbers = #tpu.dot_dimension_numbers<[1], [0], [0], [1], [0, 0, 1, 1], [], []>, precision = #tpu.contract_precision<fp32>} : vector<2x8xf32>, vector<8x128xf32>, vector<2x128xf32> -> vector<2x128xf32>
    %c0_15 = arith.constant 0 : index
    %c0_16 = arith.constant 0 : index
    %17 = vector.load %arg7[%c0_15, %c0_16] : memref<2x1xf32, #tpu.memory_space<vmem>>, vector<2x1xf32>
    %18 = vector.broadcast %17 : vector<2x1xf32> to vector<2x128xf32>
    %19 = arith.addf %16, %18 : vector<2x128xf32>
    %cst_17 = arith.constant 0.000000e+00 : f32
    %20 = vector.broadcast %cst_17 : f32 to vector<2x128xf32>
    %21 = arith.maximumf %19, %20 : vector<2x128xf32>
    %22 = vector.extract_strided_slice %21 {offsets = [0, 0], sizes = [1, 128], strides = [1, 1]} : vector<2x128xf32> to vector<1x128xf32>
    %23 = vector.extract_strided_slice %21 {offsets = [1, 0], sizes = [1, 128], strides = [1, 1]} : vector<2x128xf32> to vector<1x128xf32>
    %24 = arith.subf %22, %23 : vector<1x128xf32>
    %cst_18 = arith.constant 0.000000e+00 : f32
    %25 = vector.broadcast %cst_18 : f32 to vector<1x128xf32>
    %26 = arith.subf %25, %24 : vector<1x128xf32>
    %27 = math.exp %26 : vector<1x128xf32>
    %cst_19 = arith.constant 1.000000e+00 : f32
    %28 = vector.broadcast %cst_19 : f32 to vector<1x128xf32>
    %29 = arith.addf %28, %27 : vector<1x128xf32>
    %cst_20 = arith.constant 1.000000e+00 : f32
    %30 = vector.broadcast %cst_20 : f32 to vector<1x128xf32>
    %31 = arith.divf %30, %29 : vector<1x128xf32>
    %cst_21 = arith.constant 1.000000e+00 : f32
    %32 = vector.broadcast %cst_21 : f32 to vector<1x128xf32>
    %33 = arith.subf %32, %31 : vector<1x128xf32>
    %34 = tpu.concatenate %31, %33 in 0 : vector<1x128xf32>, vector<1x128xf32> -> vector<2x128xf32>
    %c0_22 = arith.constant 0 : index
    %c0_23 = arith.constant 0 : index
    %35 = vector.load %arg8[%c0_22, %c0_23] : memref<2x128xf32, #tpu.memory_space<vmem>>, vector<2x128xf32>
    tpu.vector_store %arg8[%c0_22, %c0_23], %34 {strides = array<i32>} : memref<2x128xf32, #tpu.memory_space<vmem>>, vector<2x128xf32>,
    return
  }
  func.func @transform_0(%arg0: i32) -> (i32, i32) {
    %c0_i32 = arith.constant 0 : i32
    %c0_i32_0 = arith.constant 0 : i32
    return %arg0, %c0_i32 : i32, i32
  }
  func.func @transform_1(%arg0: i32) -> (i32, i32) {
    %c0_i32 = arith.constant 0 : i32
    %c0_i32_0 = arith.constant 0 : i32
    %c0_i32_1 = arith.constant 0 : i32
    return %c0_i32, %c0_i32_0 : i32, i32
  }
  func.func @transform_2(%arg0: i32) -> (i32, i32) {
    %c0_i32 = arith.constant 0 : i32
    %c0_i32_0 = arith.constant 0 : i32
    %c0_i32_1 = arith.constant 0 : i32
    return %c0_i32, %c0_i32_0 : i32, i32
  }
  func.func @transform_3(%arg0: i32) -> (i32, i32) {
    %c0_i32 = arith.constant 0 : i32
    %c0_i32_0 = arith.constant 0 : i32
    %c0_i32_1 = arith.constant 0 : i32
    return %c0_i32, %c0_i32_0 : i32, i32
  }
  func.func @transform_4(%arg0: i32) -> (i32, i32) {
    %c0_i32 = arith.constant 0 : i32
    %c0_i32_0 = arith.constant 0 : i32
    %c0_i32_1 = arith.constant 0 : i32
    return %c0_i32, %c0_i32_0 : i32, i32
  }
  func.func @transform_5(%arg0: i32) -> (i32, i32) {
    %c0_i32 = arith.constant 0 : i32
    %c0_i32_0 = arith.constant 0 : i32
    %c0_i32_1 = arith.constant 0 : i32
    return %c0_i32, %c0_i32_0 : i32, i32
  }
  func.func @transform_6(%arg0: i32) -> (i32, i32) {
    %c0_i32 = arith.constant 0 : i32
    %c0_i32_0 = arith.constant 0 : i32
    %c0_i32_1 = arith.constant 0 : i32
    return %c0_i32, %c0_i32_0 : i32, i32
  }
  func.func @transform_7(%arg0: i32) -> (i32, i32) {
    %c0_i32 = arith.constant 0 : i32
    %c0_i32_0 = arith.constant 0 : i32
    return %c0_i32, %arg0 : i32, i32
  }
}

</mosaic_0001>

<llo_original>
// kernel: tpu_custom_call.1
$region0: #{tpu_custom_call.1}
  #allocation0 [shape = 'u32[]', space=smem, size = 0x4, offset = 0x4, fixed_abs, tag = 'smem constant byte address 0x4 - core index']
  #allocation1 [shape = 'u32[144,128]{1,0:T(1,128)}', space=vmem, size = 0x12000, scoped, tag = 'internal scratch']
  %s0 = inlined_call_operand.vmem [shape: f32[256,32], index: 0, kind: input, shape index: {}]
  %s1 = inlined_call_operand.vmem [shape: f32[16,32], index: 1, kind: input, shape index: {}]
  %s2 = inlined_call_operand.vmem [shape: f32[16,1], index: 2, kind: input, shape index: {}]
  %s3 = inlined_call_operand.vmem [shape: f32[8,16], index: 3, kind: input, shape index: {}]
  %s4 = inlined_call_operand.vmem [shape: f32[8,1], index: 4, kind: input, shape index: {}]
  %s5 = inlined_call_operand.vmem [shape: f32[2,8], index: 5, kind: input, shape index: {}]
  %s6 = inlined_call_operand.vmem [shape: f32[2,1], index: 6, kind: input, shape index: {}]
  %s7 = inlined_call_operand.hbm [shape: f32[2,256], index: 7, kind: output, shape index: {}]
  %s8 = sld [smem:[#allocation0]]
  $region61: #{tpu_custom_call.1} parent=0
    _
  %s10 = ssub.s32 1, %s8
  %s11 = scalar_select 0, %s10, %s8
  $region1: #{tpu_custom_call.1} parent=0
    #allocation2 [shape = 'u8[2048]{0}', space=vmem, size = 0x800, scoped, tag = 'output window, operand 0']
    #allocation3 [shape = 's32[2]{0}', space=sflag, size = 0x8, scoped, tag = 'scoped memory for tpu_custom_call.1']
    %12 = vsyncpa [#allocation3], 0
    %s13 = scalar_lea.sflag [#allocation3], 1
    %14 = vsyncpa %s13, 0
    loop: start=0, step=1, limit=4
    $region2: #{tpu_custom_call.1} parent=1 // loop_pre_header
      _
    $region3: #{tpu_custom_call.1} parent=1 // loop_header
      %s16 = sphi 0, %s20
      %p17 = scmp.ge.s32.totalorder %s16, 4
      %s26 = sphi 0, %s28
      %s29 = sphi 0, %s26
      %s30 = sphi 0, %s29
      %s46 = sphi 0, %s30
      %s50 = sphi 0, %s50
      %s52 = sphi 0, %s50
      %s53 = sphi 0, %s52
      %s67 = sphi 0, %s53
      %s71 = sphi 0, %s71
      %s73 = sphi 0, %s71
      %s74 = sphi 0, %s73
      %s88 = sphi 0, %s74
      %s92 = sphi 0, %s92
      %s94 = sphi 0, %s92
      %s95 = sphi 0, %s94
      %s109 = sphi 0, %s95
      %s113 = sphi 0, %s113
      %s115 = sphi 0, %s113
      %s116 = sphi 0, %s115
      %s130 = sphi 0, %s116
      %s134 = sphi 0, %s134
      %s136 = sphi 0, %s134
      %s137 = sphi 0, %s136
      %s151 = sphi 0, %s137
      %s155 = sphi 0, %s155
      %s157 = sphi 0, %s155
      %s158 = sphi 0, %s157
      %s172 = sphi 0, %s158
      %s178 = sphi 0, %s180
      %s181 = sphi 0, %s178
      %s182 = sphi 0, %s181
      %s198 = sphi 0, %s182
    $region4: #{tpu_custom_call.1} parent=1 // loop_header_branch
      %19 = sbr.rel (%p17) target = $region8
    $region5: #{tpu_custom_call.1} parent=1 // loop_body
      %s21 = ssub.s32 %s16, 1
      %s22 = ssub.s32 %s16, 2
      %s23 = sadd.s32 %s16, 1
      %s24 = ssub.s32 %s16, %s23
      %p25 = scmp.eq.s32.totalorder %s24, 0
      %s27 = sadd.s32 %s26, 1
      %s28 = scalar_select %p25, %s26, %s27
      %p31 = pneg %p25
      %p32 = scmp.eq.s32.totalorder %s16, 1
      %p33 = por %p31, %p32
      %p34 = scmp.ne.s32.totalorder %s26, %s29
      %p35 = scmp.eq.s32.totalorder %s16, 0
      %p36 = por %p34, %p35
      %p37 = scmp.ne.s32.totalorder %s26, %s29
      %p38 = scmp.eq.s32.totalorder %s21, 1
      %p39 = por %p37, %p38
      %p40 = scmp.ne.s32.totalorder %s29, %s30
      %p41 = scmp.eq.s32.totalorder %s21, 0
      %p42 = por %p40, %p41
      %p43 = scmp.ne.s32.totalorder %s29, %s30
      %p44 = scmp.eq.s32.totalorder %s22, 1
      %p45 = por %p43, %p44
      %p47 = scmp.ne.s32.totalorder %s30, %s46
      %p48 = scmp.eq.s32.totalorder %s22, 0
      %p49 = por %p47, %p48
      %s51 = sadd.s32 %s50, 1
      %p54 = scmp.eq.s32.totalorder %s16, 1
      %p55 = scmp.ne.s32.totalorder %s50, %s52
      %p56 = scmp.eq.s32.totalorder %s16, 0
      %p57 = por %p55, %p56
      %p58 = scmp.ne.s32.totalorder %s50, %s52
      %p59 = scmp.eq.s32.totalorder %s21, 1
      %p60 = por %p58, %p59
      %p61 = scmp.ne.s32.totalorder %s52, %s53
      %p62 = scmp.eq.s32.totalorder %s21, 0
      %p63 = por %p61, %p62
      %p64 = scmp.ne.s32.totalorder %s52, %s53
      %p65 = scmp.eq.s32.totalorder %s22, 1
      %p66 = por %p64, %p65
      %p68 = scmp.ne.s32.totalorder %s53, %s67
      %p69 = scmp.eq.s32.totalorder %s22, 0
      %p70 = por %p68, %p69
      %s72 = sadd.s32 %s71, 1
      %p75 = scmp.eq.s32.totalorder %s16, 1
      %p76 = scmp.ne.s32.totalorder %s71, %s73
      %p77 = scmp.eq.s32.totalorder %s16, 0
      %p78 = por %p76, %p77
      %p79 = scmp.ne.s32.totalorder %s71, %s73
      %p80 = scmp.eq.s32.totalorder %s21, 1
      %p81 = por %p79, %p80
      %p82 = scmp.ne.s32.totalorder %s73, %s74
      %p83 = scmp.eq.s32.totalorder %s21, 0
      %p84 = por %p82, %p83
      %p85 = scmp.ne.s32.totalorder %s73, %s74
      %p86 = scmp.eq.s32.totalorder %s22, 1
      %p87 = por %p85, %p86
      %p89 = scmp.ne.s32.totalorder %s74, %s88
      %p90 = scmp.eq.s32.totalorder %s22, 0
      %p91 = por %p89, %p90
      %s93 = sadd.s32 %s92, 1
      %p96 = scmp.eq.s32.totalorder %s16, 1
      %p97 = scmp.ne.s32.totalorder %s92, %s94
      %p98 = scmp.eq.s32.totalorder %s16, 0
      %p99 = por %p97, %p98
      %p100 = scmp.ne.s32.totalorder %s92, %s94
      %p101 = scmp.eq.s32.totalorder %s21, 1
      %p102 = por %p100, %p101
      %p103 = scmp.ne.s32.totalorder %s94, %s95
      %p104 = scmp.eq.s32.totalorder %s21, 0
      %p105 = por %p103, %p104
      %p106 = scmp.ne.s32.totalorder %s94, %s95
      %p107 = scmp.eq.s32.totalorder %s22, 1
      %p108 = por %p106, %p107
      %p110 = scmp.ne.s32.totalorder %s95, %s109
      %p111 = scmp.eq.s32.totalorder %s22, 0
      %p112 = por %p110, %p111
      %s114 = sadd.s32 %s113, 1
      %p117 = scmp.eq.s32.totalorder %s16, 1
      %p118 = scmp.ne.s32.totalorder %s113, %s115
      %p119 = scmp.eq.s32.totalorder %s16, 0
      %p120 = por %p118, %p119
      %p121 = scmp.ne.s32.totalorder %s113, %s115
      %p122 = scmp.eq.s32.totalorder %s21, 1
      %p123 = por %p121, %p122
      %p124 = scmp.ne.s32.totalorder %s115, %s116
      %p125 = scmp.eq.s32.totalorder %s21, 0
      %p126 = por %p124, %p125
      %p127 = scmp.ne.s32.totalorder %s115, %s116
      %p128 = scmp.eq.s32.totalorder %s22, 1
      %p129 = por %p127, %p128
      %p131 = scmp.ne.s32.totalorder %s116, %s130
      %p132 = scmp.eq.s32.totalorder %s22, 0
      %p133 = por %p131, %p132
      %s135 = sadd.s32 %s134, 1
      %p138 = scmp.eq.s32.totalorder %s16, 1
      %p139 = scmp.ne.s32.totalorder %s134, %s136
      %p140 = scmp.eq.s32.totalorder %s16, 0
      %p141 = por %p139, %p140
      %p142 = scmp.ne.s32.totalorder %s134, %s136
      %p143 = scmp.eq.s32.totalorder %s21, 1
      %p144 = por %p142, %p143
      %p145 = scmp.ne.s32.totalorder %s136, %s137
      %p146 = scmp.eq.s32.totalorder %s21, 0
      %p147 = por %p145, %p146
      %p148 = scmp.ne.s32.totalorder %s136, %s137
      %p149 = scmp.eq.s32.totalorder %s22, 1
      %p150 = por %p148, %p149
      %p152 = scmp.ne.s32.totalorder %s137, %s151
      %p153 = scmp.eq.s32.totalorder %s22, 0
      %p154 = por %p152, %p153
      %s156 = sadd.s32 %s155, 1
      %p159 = scmp.eq.s32.totalorder %s16, 1
      %p160 = scmp.ne.s32.totalorder %s155, %s157
      %p161 = scmp.eq.s32.totalorder %s16, 0
      %p162 = por %p160, %p161
      %p163 = scmp.ne.s32.totalorder %s155, %s157
      %p164 = scmp.eq.s32.totalorder %s21, 1
      %p165 = por %p163, %p164
      %p166 = scmp.ne.s32.totalorder %s157, %s158
      %p167 = scmp.eq.s32.totalorder %s21, 0
      %p168 = por %p166, %p167
      %p169 = scmp.ne.s32.totalorder %s157, %s158
      %p170 = scmp.eq.s32.totalorder %s22, 1
      %p171 = por %p169, %p170
      %p173 = scmp.ne.s32.totalorder %s158, %s172
      %p174 = scmp.eq.s32.totalorder %s22, 0
      %p175 = por %p173, %p174
      %s176 = ssub.s32 %s16, %s23
      %p177 = scmp.eq.s32.totalorder %s176, 0
      %s179 = sadd.s32 %s178, 1
      %s180 = scalar_select %p177, %s178, %s179
      %p183 = pneg %p177
      %p184 = scmp.eq.s32.totalorder %s16, 1
      %p185 = por %p183, %p184
      %p186 = scmp.ne.s32.totalorder %s178, %s181
      %p187 = scmp.eq.s32.totalorder %s16, 0
      %p188 = por %p186, %p187
      %p189 = scmp.ne.s32.totalorder %s178, %s181
      %p190 = scmp.eq.s32.totalorder %s21, 1
      %p191 = por %p189, %p190
      %p192 = scmp.ne.s32.totalorder %s181, %s182
      %p193 = scmp.eq.s32.totalorder %s21, 0
      %p194 = por %p192, %p193
      %p195 = scmp.ne.s32.totalorder %s181, %s182
      %p196 = scmp.eq.s32.totalorder %s22, 1
      %p197 = por %p195, %p196
      %p199 = scmp.ne.s32.totalorder %s182, %s198
      %p200 = scmp.eq.s32.totalorder %s22, 0
      %p201 = por %p199, %p200
      %p202 = scmp.le.s32.totalorder 1, %s16
      %p203 = scmp.lt.s32.totalorder %s16, 3
      %p204 = pnand %p202, %p203
      %p205 = pneg %p204
      // Predicated region
      $region9: #{tpu_custom_call.1} parent=5 // pred_check
        _
      $region10: #{tpu_custom_call.1} parent=5 // pred_check_branch
        %207 = sbr.rel (%p204) target = $region12
      $region11: #{tpu_custom_call.1} parent=5 // pred_region
        %s208 = ssub.s32 %s16, 1
        // Predicated region
        $region13: #{tpu_custom_call.1} parent=11 // pred_check
          %p209 = pneg %p63
        $region14: #{tpu_custom_call.1} parent=11 // pred_check_branch
          %211 = sbr.rel (%p209) target = $region16
        $region15: #{tpu_custom_call.1} parent=11 // pred_region
          _
        $region16: #{tpu_custom_call.1} parent=11 // pred_fallthru
          _
        // Predicated region
        $region17: #{tpu_custom_call.1} parent=11 // pred_check
          %p212 = pneg %p84
        $region18: #{tpu_custom_call.1} parent=11 // pred_check_branch
          %214 = sbr.rel (%p212) target = $region20
        $region19: #{tpu_custom_call.1} parent=11 // pred_region
          _
        $region20: #{tpu_custom_call.1} parent=11 // pred_fallthru
          _
        // Predicated region
        $region21: #{tpu_custom_call.1} parent=11 // pred_check
          %p215 = pneg %p105
        $region22: #{tpu_custom_call.1} parent=11 // pred_check_branch
          %217 = sbr.rel (%p215) target = $region24
        $region23: #{tpu_custom_call.1} parent=11 // pred_region
          _
        $region24: #{tpu_custom_call.1} parent=11 // pred_fallthru
          _
        // Predicated region
        $region25: #{tpu_custom_call.1} parent=11 // pred_check
          %p218 = pneg %p126
        $region26: #{tpu_custom_call.1} parent=11 // pred_check_branch
          %220 = sbr.rel (%p218) target = $region28
        $region27: #{tpu_custom_call.1} parent=11 // pred_region
          _
        $region28: #{tpu_custom_call.1} parent=11 // pred_fallthru
          _
        // Predicated region
        $region29: #{tpu_custom_call.1} parent=11 // pred_check
          %p221 = pneg %p147
        $region30: #{tpu_custom_call.1} parent=11 // pred_check_branch
          %223 = sbr.rel (%p221) target = $region32
        $region31: #{tpu_custom_call.1} parent=11 // pred_region
          _
        $region32: #{tpu_custom_call.1} parent=11 // pred_fallthru
          _
        // Predicated region
        $region33: #{tpu_custom_call.1} parent=11 // pred_check
          %p224 = pneg %p168
        $region34: #{tpu_custom_call.1} parent=11 // pred_check_branch
          %226 = sbr.rel (%p224) target = $region36
        $region35: #{tpu_custom_call.1} parent=11 // pred_region
          _
        $region36: #{tpu_custom_call.1} parent=11 // pred_fallthru
          _
      $region12: #{tpu_custom_call.1} parent=5 // pred_fallthru
        _
      %p227 = scmp.lt.s32.totalorder %s16, 2
      // Predicated region
      $region37: #{tpu_custom_call.1} parent=5 // pred_check
        %p228 = pneg %p227
      $region38: #{tpu_custom_call.1} parent=5 // pred_check_branch
        %230 = sbr.rel (%p228) target = $region40
      $region39: #{tpu_custom_call.1} parent=5 // pred_region
        // Predicated region
        $region41: #{tpu_custom_call.1} parent=39 // pred_check
          %p231 = pneg %p36
        $region42: #{tpu_custom_call.1} parent=39 // pred_check_branch
          %233 = sbr.rel (%p231) target = $region44
        $region43: #{tpu_custom_call.1} parent=39 // pred_region
          %s234 = smul.u32 16, %s16
          %p235 = scmp.lt.s32.totalorder %s234, 31
          %s236 = scalar_select %p235, %s234, 31
          %s237 = smul.addr %s236, 8
          %s238 = scalar_lea.vmem %s0, %s237
          %s239 = smul.u32 16, %s16
        $region44: #{tpu_custom_call.1} parent=39 // pred_fallthru
          _
      $region40: #{tpu_custom_call.1} parent=5 // pred_fallthru
        _
      %p240 = scmp.le.s32.totalorder 1, %s16
      %p241 = scmp.lt.s32.totalorder %s16, 3
      %p242 = pnand %p240, %p241
      %p243 = pneg %p242
      // Predicated region
      $region45: #{tpu_custom_call.1} parent=5 // pred_check
        _
      $region46: #{tpu_custom_call.1} parent=5 // pred_check_branch
        %245 = sbr.rel (%p242) target = $region48
      $region47: #{tpu_custom_call.1} parent=5 // pred_region
        %s246 = ssub.s32 %s16, 1
        %s247 = smul.u32 16, %s21
        %p248 = scmp.lt.s32.totalorder %s247, 31
        %s249 = scalar_select %p248, %s247, 31
        %s250 = smul.addr %s249, 8
        %s251 = scalar_lea.vmem %s0, %s250
        %p252 = pneg %p42
        %p253 = pneg %p39
        %p254 = pneg %p63
        %p255 = pneg %p60
        %p256 = pneg %p84
        %p257 = pneg %p81
        %p258 = pneg %p105
        %p259 = pneg %p102
        %p260 = pneg %p126
        %p261 = pneg %p123
        %p262 = pneg %p147
        %p263 = pneg %p144
        %p264 = pneg %p168
        %p265 = pneg %p165
        %p266 = pneg %p194
        %p267 = pneg %p191
        %s268 = sand.u32 %s181, 1
        %s269 = scalar_lea.sflag [#allocation3], %s268
        %s270 = sand.u32 %s181, 1
        %s271 = smul.addr %s270, 2
        %s272 = scalar_lea.vmem [#allocation2], %s271
        %s273 = smul.u32 16, %s21
        %p274 = scmp.lt.s32.totalorder %s273, 31
        %s275 = scalar_select %p274, %s273, 31
        %s276 = smul.addr %s275, 8
        %s277 = scalar_lea.vmem %s0, %s276
        %s278 = smul.u32 16, %s21
        %v279 = vld [vmem:[%s277] sm:$0xff]
        %v280 = vld [vmem:[%s277 + $0x8] sm:$0xff]
        %v281 = vld [vmem:[%s277 + $0x10] sm:$0xff]
        %v282 = vld [vmem:[%s277 + $0x18] sm:$0xff]
        %v283 = vld [vmem:[%s277 + $0x20] sm:$0xff]
        %v284 = vld [vmem:[%s277 + $0x28] sm:$0xff]
        %v285 = vld [vmem:[%s277 + $0x30] sm:$0xff]
        %v286 = vld [vmem:[%s277 + $0x38] sm:$0xff]
        %v287 = vld [vmem:[%s277 + $0x40] sm:$0xff]
        %v288 = vld [vmem:[%s277 + $0x48] sm:$0xff]
        %v289 = vld [vmem:[%s277 + $0x50] sm:$0xff]
        %v290 = vld [vmem:[%s277 + $0x58] sm:$0xff]
        %v291 = vld [vmem:[%s277 + $0x60] sm:$0xff]
        %v292 = vld [vmem:[%s277 + $0x68] sm:$0xff]
        %v293 = vld [vmem:[%s277 + $0x70] sm:$0xff]
        %v294 = vld [vmem:[%s277 + $0x78] sm:$0xff]
        %v295 = vld [vmem:[%s1] sm:$0xff]
        %v296 = vld [vmem:[%s1 + $0x8] sm:$0xff]
        %v297 = vld [vmem:[%s2] sm:$0xff]
        %v298 = vld [vmem:[%s2 + $0x8] sm:$0xff]
        %300 = vset.pattern.permute.xlu0 0
        %301 = vperm.xlu0 %300, %v297
        %v302 = vpop.permute.xlu0 %301
        %305 = vset.pattern.permute.xlu0 0
        %306 = vperm.xlu0 %305, %v298
        %v307 = vpop.permute.xlu0 %306
        %vm309 = vcmask 261120
        %v311 = vsel %vm309, %v295, 0
        %v314 = vsel %vm309, %v296, 0
        %v317 = vsel %vm309, %v279, 0
        %v320 = vsel %vm309, %v280, 0
        %v323 = vsel %vm309, %v281, 0
        %v326 = vsel %vm309, %v282, 0
        %v329 = vsel %vm309, %v283, 0
        %v332 = vsel %vm309, %v284, 0
        %v335 = vsel %vm309, %v285, 0
        %v338 = vsel %vm309, %v286, 0
        %v341 = vsel %vm309, %v287, 0
        %v344 = vsel %vm309, %v288, 0
        %v347 = vsel %vm309, %v289, 0
        %v350 = vsel %vm309, %v290, 0
        %v353 = vsel %vm309, %v291, 0
        %v356 = vsel %vm309, %v292, 0
        %v359 = vsel %vm309, %v293, 0
        %v362 = vsel %vm309, %v294, 0
        %364 = vmatprep.subr.mxu0 0.0
        %v365 = vand.u32 %v362, 4294901760
        %366 = vmatpush1.xpose.msra.mxu0 %v365
        %367 = vmatprep.subr.mxu0 0.0
        %v368 = vand.u32 %v359, 4294901760
        %369 = vmatpush1.xpose.msra.mxu0 %v368
        %370 = vmatprep.subr.mxu0 0.0
        %v371 = vand.u32 %v356, 4294901760
        %372 = vmatpush1.xpose.msra.mxu0 %v371
        %373 = vmatprep.subr.mxu0 0.0
        %v374 = vand.u32 %v353, 4294901760
        %375 = vmatpush1.xpose.msra.mxu0 %v374
        %376 = vmatprep.subr.mxu0 0.0
        %v377 = vand.u32 %v350, 4294901760
        %378 = vmatpush1.xpose.msra.mxu0 %v377
        %379 = vmatprep.subr.mxu0 0.0
        %v380 = vand.u32 %v347, 4294901760
        %381 = vmatpush1.xpose.msra.mxu0 %v380
        %382 = vmatprep.subr.mxu0 0.0
        %v383 = vand.u32 %v344, 4294901760
        %384 = vmatpush1.xpose.msra.mxu0 %v383
        %385 = vmatprep.subr.mxu0 0.0
        %v386 = vand.u32 %v341, 4294901760
        %387 = vmatpush1.xpose.msra.mxu0 %v386
        %388 = vmatprep.subr.mxu0 0.0
        %v389 = vand.u32 %v338, 4294901760
        %390 = vmatpush1.xpose.msra.mxu0 %v389
        %391 = vmatprep.subr.mxu0 0.0
        %v392 = vand.u32 %v335, 4294901760
        %393 = vmatpush1.xpose.msra.mxu0 %v392
        %394 = vmatprep.subr.mxu0 0.0
        %v395 = vand.u32 %v332, 4294901760
        %396 = vmatpush1.xpose.msra.mxu0 %v395
        %397 = vmatprep.subr.mxu0 0.0
        %v398 = vand.u32 %v329, 4294901760
        %399 = vmatpush1.xpose.msra.mxu0 %v398
        %400 = vmatprep.subr.mxu0 0.0
        %v401 = vand.u32 %v326, 4294901760
        %402 = vmatpush1.xpose.msra.mxu0 %v401
        %403 = vmatprep.subr.mxu0 0.0
        %v404 = vand.u32 %v323, 4294901760
        %405 = vmatpush1.xpose.msra.mxu0 %v404
        %406 = vmatprep.subr.mxu0 0.0
        %v407 = vand.u32 %v320, 4294901760
        %408 = vmatpush1.xpose.msra.mxu0 %v407
        %409 = vmatprep.subr.mxu0 0.0
        %v410 = vand.u32 %v317, 4294901760
        %411 = vmatpush1.xpose.msra.mxu0 %v410
        %412 = vmatprep.subr.mxu0 0.0
        %413 = vmatpush2.xpose.msra.mxu0 0.0
        %414 = vmatprep.subr.mxu0 0.0
        %415 = vmatpush2.xpose.msra.mxu0 0.0
        %416 = vmatprep.subr.mxu0 0.0
        %417 = vmatpush2.xpose.msra.mxu0 0.0
        %418 = vmatprep.subr.mxu0 0.0
        %419 = vmatpush2.xpose.msra.mxu0 0.0
        %420 = vmatprep.subr.mxu0 0.0
        %421 = vmatpush2.xpose.msra.mxu0 0.0
        %422 = vmatprep.subr.mxu0 0.0
        %423 = vmatpush2.xpose.msra.mxu0 0.0
        %424 = vmatprep.subr.mxu0 0.0
        %425 = vmatpush2.xpose.msra.mxu0 0.0
        %426 = vmatprep.subr.mxu0 0.0
        %427 = vmatpush2.xpose.msra.mxu0 0.0
        %428 = vmatprep.subr.mxu0 0.0
        %429 = vmatpush2.xpose.msra.mxu0 0.0
        %430 = vmatprep.subr.mxu0 0.0
        %431 = vmatpush2.xpose.msra.mxu0 0.0
        %432 = vmatprep.subr.mxu0 0.0
        %433 = vmatpush2.xpose.msra.mxu0 0.0
        %434 = vmatprep.subr.mxu0 0.0
        %435 = vmatpush2.xpose.msra.mxu0 0.0
        %436 = vmatprep.subr.mxu0 0.0
        %437 = vmatpush2.xpose.msra.mxu0 0.0
        %438 = vmatprep.subr.mxu0 0.0
        %439 = vmatpush2.xpose.msra.mxu0 0.0
        %440 = vmatprep.subr.mxu0 0.0
        %441 = vmatpush2.xpose.msra.mxu0 0.0
        %442 = vmatprep.subr.mxu0 0.0
        %443 = vmatpush2.xpose.msra.mxu0 0.0
        %444 = vmatprep.mubr.f32.mxu0 0.0
        %v445 = vand.u32 %v311, 4294901760
        %v446 = vsub.f32 %v311, %v445
        %v447 = vand.u32 %v446, 4294901760
        %v448 = vsub.f32 %v446, %v447
        %v449 = vand.u32 %v448, 4294901760
        %450 = vmatmul.mubr.f32.gmra.mxu0 %v449
        %v451 = vpop.f32.mrf.mxu0
        %v452 = vadd.f32 %v302, %v451
        %v453 = vpop.f32.mrf.mxu0
        %454 = vmatprep.mubr.f32.mxu0 0.0
        %v455 = vand.u32 %v314, 4294901760
        %v456 = vsub.f32 %v314, %v455
        %v457 = vand.u32 %v456, 4294901760
        %v458 = vsub.f32 %v456, %v457
        %v459 = vand.u32 %v458, 4294901760
        %460 = vmatmul.mubr.f32.gmra.mxu0 %v459
        %v461 = vpop.f32.mrf.mxu0
        %v462 = vadd.f32 %v307, %v461
        %v463 = vpop.f32.mrf.mxu0
        %464 = vdwg.mxu0
        %465 = vmatprep.subr.mxu0 0.0
        %v466 = vand.u32 %v362, 4294901760
        %v467 = vsub.f32 %v362, %v466
        %v468 = vand.u32 %v467, 4294901760
        %v469 = vsub.f32 %v467, %v468
        %v470 = vand.u32 %v469, 4294901760
        %471 = vmatpush1.xpose.msra.mxu0 %v470
        %472 = vmatprep.subr.mxu0 0.0
        %v473 = vand.u32 %v359, 4294901760
        %v474 = vsub.f32 %v359, %v473
        %v475 = vand.u32 %v474, 4294901760
        %v476 = vsub.f32 %v474, %v475
        %v477 = vand.u32 %v476, 4294901760
        %478 = vmatpush1.xpose.msra.mxu0 %v477
        %479 = vmatprep.subr.mxu0 0.0
        %v480 = vand.u32 %v356, 4294901760
        %v481 = vsub.f32 %v356, %v480
        %v482 = vand.u32 %v481, 4294901760
        %v483 = vsub.f32 %v481, %v482
        %v484 = vand.u32 %v483, 4294901760
        %485 = vmatpush1.xpose.msra.mxu0 %v484
        %486 = vmatprep.subr.mxu0 0.0
        %v487 = vand.u32 %v353, 4294901760
        %v488 = vsub.f32 %v353, %v487
        %v489 = vand.u32 %v488, 4294901760
        %v490 = vsub.f32 %v488, %v489
        %v491 = vand.u32 %v490, 4294901760
        %492 = vmatpush1.xpose.msra.mxu0 %v491
        %493 = vmatprep.subr.mxu0 0.0
        %v494 = vand.u32 %v350, 4294901760
        %v495 = vsub.f32 %v350, %v494
        %v496 = vand.u32 %v495, 4294901760
        %v497 = vsub.f32 %v495, %v496
        %v498 = vand.u32 %v497, 4294901760
        %499 = vmatpush1.xpose.msra.mxu0 %v498
        %500 = vmatprep.subr.mxu0 0.0
        %v501 = vand.u32 %v347, 4294901760
        %v502 = vsub.f32 %v347, %v501
        %v503 = vand.u32 %v502, 4294901760
        %v504 = vsub.f32 %v502, %v503
        %v505 = vand.u32 %v504, 4294901760
        %506 = vmatpush1.xpose.msra.mxu0 %v505
        %507 = vmatprep.subr.mxu0 0.0
        %v508 = vand.u32 %v344, 4294901760
        %v509 = vsub.f32 %v344, %v508
        %v510 = vand.u32 %v509, 4294901760
        %v511 = vsub.f32 %v509, %v510
        %v512 = vand.u32 %v511, 4294901760
        %513 = vmatpush1.xpose.msra.mxu0 %v512
        %514 = vmatprep.subr.mxu0 0.0
        %v515 = vand.u32 %v341, 4294901760
        %v516 = vsub.f32 %v341, %v515
        %v517 = vand.u32 %v516, 4294901760
        %v518 = vsub.f32 %v516, %v517
        %v519 = vand.u32 %v518, 4294901760
        %520 = vmatpush1.xpose.msra.mxu0 %v519
        %521 = vmatprep.subr.mxu0 0.0
        %v522 = vand.u32 %v338, 4294901760
        %v523 = vsub.f32 %v338, %v522
        %v524 = vand.u32 %v523, 4294901760
        %v525 = vsub.f32 %v523, %v524
        %v526 = vand.u32 %v525, 4294901760
        %527 = vmatpush1.xpose.msra.mxu0 %v526
        %528 = vmatprep.subr.mxu0 0.0
        %v529 = vand.u32 %v335, 4294901760
        %v530 = vsub.f32 %v335, %v529
        %v531 = vand.u32 %v530, 4294901760
        %v532 = vsub.f32 %v530, %v531
        %v533 = vand.u32 %v532, 4294901760
        %534 = vmatpush1.xpose.msra.mxu0 %v533
        %535 = vmatprep.subr.mxu0 0.0
        %v536 = vand.u32 %v332, 4294901760
        %v537 = vsub.f32 %v332, %v536
        %v538 = vand.u32 %v537, 4294901760
        %v539 = vsub.f32 %v537, %v538
        %v540 = vand.u32 %v539, 4294901760
        %541 = vmatpush1.xpose.msra.mxu0 %v540
        %542 = vmatprep.subr.mxu0 0.0
        %v543 = vand.u32 %v329, 4294901760
        %v544 = vsub.f32 %v329, %v543
        %v545 = vand.u32 %v544, 4294901760
        %v546 = vsub.f32 %v544, %v545
        %v547 = vand.u32 %v546, 4294901760
        %548 = vmatpush1.xpose.msra.mxu0 %v547
        %549 = vmatprep.subr.mxu0 0.0
        %v550 = vand.u32 %v326, 4294901760
        %v551 = vsub.f32 %v326, %v550
        %v552 = vand.u32 %v551, 4294901760
        %v553 = vsub.f32 %v551, %v552
        %v554 = vand.u32 %v553, 4294901760
        %555 = vmatpush1.xpose.msra.mxu0 %v554
        %556 = vmatprep.subr.mxu0 0.0
        %v557 = vand.u32 %v323, 4294901760
        %v558 = vsub.f32 %v323, %v557
        %v559 = vand.u32 %v558, 4294901760
        %v560 = vsub.f32 %v558, %v559
        %v561 = vand.u32 %v560, 4294901760
        %562 = vmatpush1.xpose.msra.mxu0 %v561
        %563 = vmatprep.subr.mxu0 0.0
        %v564 = vand.u32 %v320, 4294901760
        %v565 = vsub.f32 %v320, %v564
        %v566 = vand.u32 %v565, 4294901760
        %v567 = vsub.f32 %v565, %v566
        %v568 = vand.u32 %v567, 4294901760
        %569 = vmatpush1.xpose.msra.mxu0 %v568
        %570 = vmatprep.subr.mxu0 0.0
        %v571 = vand.u32 %v317, 4294901760
        %v572 = vsub.f32 %v317, %v571
        %v573 = vand.u32 %v572, 4294901760
        %v574 = vsub.f32 %v572, %v573
        %v575 = vand.u32 %v574, 4294901760
        %576 = vmatpush1.xpose.msra.mxu0 %v575
        %577 = vmatprep.subr.mxu0 0.0
        %578 = vmatpush2.xpose.msra.mxu0 0.0
        %579 = vmatprep.subr.mxu0 0.0
        %580 = vmatpush2.xpose.msra.mxu0 0.0
        %581 = vmatprep.subr.mxu0 0.0
        %582 = vmatpush2.xpose.msra.mxu0 0.0
        %583 = vmatprep.subr.mxu0 0.0
        %584 = vmatpush2.xpose.msra.mxu0 0.0
        %585 = vmatprep.subr.mxu0 0.0
        %586 = vmatpush2.xpose.msra.mxu0 0.0
        %587 = vmatprep.subr.mxu0 0.0
        %588 = vmatpush2.xpose.msra.mxu0 0.0
        %589 = vmatprep.subr.mxu0 0.0
        %590 = vmatpush2.xpose.msra.mxu0 0.0
        %591 = vmatprep.subr.mxu0 0.0
        %592 = vmatpush2.xpose.msra.mxu0 0.0
        %593 = vmatprep.subr.mxu0 0.0
        %594 = vmatpush2.xpose.msra.mxu0 0.0
        %595 = vmatprep.subr.mxu0 0.0
        %596 = vmatpush2.xpose.msra.mxu0 0.0
        %597 = vmatprep.subr.mxu0 0.0
        %598 = vmatpush2.xpose.msra.mxu0 0.0
        %599 = vmatprep.subr.mxu0 0.0
        %600 = vmatpush2.xpose.msra.mxu0 0.0
        %601 = vmatprep.subr.mxu0 0.0
        %602 = vmatpush2.xpose.msra.mxu0 0.0
        %603 = vmatprep.subr.mxu0 0.0
        %604 = vmatpush2.xpose.msra.mxu0 0.0
        %605 = vmatprep.subr.mxu0 0.0
        %606 = vmatpush2.xpose.msra.mxu0 0.0
        %607 = vmatprep.subr.mxu0 0.0
        %608 = vmatpush2.xpose.msra.mxu0 0.0
        %609 = vmatprep.mubr.f32.mxu0 0.0
        %v610 = vand.u32 %v311, 4294901760
        %611 = vmatmul.mubr.f32.gmra.mxu0 %v610
        %v612 = vpop.f32.mrf.mxu0
        %v613 = vadd.f32 %v452, %v612
        %v614 = vpop.f32.mrf.mxu0
        %615 = vmatprep.mubr.f32.mxu0 0.0
        %v616 = vand.u32 %v314, 4294901760
        %617 = vmatmul.mubr.f32.gmra.mxu0 %v616
        %v618 = vpop.f32.mrf.mxu0
        %v619 = vadd.f32 %v462, %v618
        %v620 = vpop.f32.mrf.mxu0
        %621 = vdwg.mxu0
        %622 = vmatprep.subr.mxu0 0.0
        %v623 = vand.u32 %v362, 4294901760
        %v624 = vsub.f32 %v362, %v623
        %625 = vmatpush1.xpose.msra.mxu0 %v624
        %626 = vmatprep.subr.mxu0 0.0
        %v627 = vand.u32 %v359, 4294901760
        %v628 = vsub.f32 %v359, %v627
        %629 = vmatpush1.xpose.msra.mxu0 %v628
        %630 = vmatprep.subr.mxu0 0.0
        %v631 = vand.u32 %v356, 4294901760
        %v632 = vsub.f32 %v356, %v631
        %633 = vmatpush1.xpose.msra.mxu0 %v632
        %634 = vmatprep.subr.mxu0 0.0
        %v635 = vand.u32 %v353, 4294901760
        %v636 = vsub.f32 %v353, %v635
        %637 = vmatpush1.xpose.msra.mxu0 %v636
        %638 = vmatprep.subr.mxu0 0.0
        %v639 = vand.u32 %v350, 4294901760
        %v640 = vsub.f32 %v350, %v639
        %641 = vmatpush1.xpose.msra.mxu0 %v640
        %642 = vmatprep.subr.mxu0 0.0
        %v643 = vand.u32 %v347, 4294901760
        %v644 = vsub.f32 %v347, %v643
        %645 = vmatpush1.xpose.msra.mxu0 %v644
        %646 = vmatprep.subr.mxu0 0.0
        %v647 = vand.u32 %v344, 4294901760
        %v648 = vsub.f32 %v344, %v647
        %649 = vmatpush1.xpose.msra.mxu0 %v648
        %650 = vmatprep.subr.mxu0 0.0
        %v651 = vand.u32 %v341, 4294901760
        %v652 = vsub.f32 %v341, %v651
        %653 = vmatpush1.xpose.msra.mxu0 %v652
        %654 = vmatprep.subr.mxu0 0.0
        %v655 = vand.u32 %v338, 4294901760
        %v656 = vsub.f32 %v338, %v655
        %657 = vmatpush1.xpose.msra.mxu0 %v656
        %658 = vmatprep.subr.mxu0 0.0
        %v659 = vand.u32 %v335, 4294901760
        %v660 = vsub.f32 %v335, %v659
        %661 = vmatpush1.xpose.msra.mxu0 %v660
        %662 = vmatprep.subr.mxu0 0.0
        %v663 = vand.u32 %v332, 4294901760
        %v664 = vsub.f32 %v332, %v663
        %665 = vmatpush1.xpose.msra.mxu0 %v664
        %666 = vmatprep.subr.mxu0 0.0
        %v667 = vand.u32 %v329, 4294901760
        %v668 = vsub.f32 %v329, %v667
        %669 = vmatpush1.xpose.msra.mxu0 %v668
        %670 = vmatprep.subr.mxu0 0.0
        %v671 = vand.u32 %v326, 4294901760
        %v672 = vsub.f32 %v326, %v671
        %673 = vmatpush1.xpose.msra.mxu0 %v672
        %674 = vmatprep.subr.mxu0 0.0
        %v675 = vand.u32 %v323, 4294901760
        %v676 = vsub.f32 %v323, %v675
        %677 = vmatpush1.xpose.msra.mxu0 %v676
        %678 = vmatprep.subr.mxu0 0.0
        %v679 = vand.u32 %v320, 4294901760
        %v680 = vsub.f32 %v320, %v679
        %681 = vmatpush1.xpose.msra.mxu0 %v680
        %682 = vmatprep.subr.mxu0 0.0
        %v683 = vand.u32 %v317, 4294901760
        %v684 = vsub.f32 %v317, %v683
        %685 = vmatpush1.xpose.msra.mxu0 %v684
        %686 = vmatprep.subr.mxu0 0.0
        %687 = vmatpush2.xpose.msra.mxu0 0.0
        %688 = vmatprep.subr.mxu0 0.0
        %689 = vmatpush2.xpose.msra.mxu0 0.0
        %690 = vmatprep.subr.mxu0 0.0
        %691 = vmatpush2.xpose.msra.mxu0 0.0
        %692 = vmatprep.subr.mxu0 0.0
        %693 = vmatpush2.xpose.msra.mxu0 0.0
        %694 = vmatprep.subr.mxu0 0.0
        %695 = vmatpush2.xpose.msra.mxu0 0.0
        %696 = vmatprep.subr.mxu0 0.0
        %697 = vmatpush2.xpose.msra.mxu0 0.0
        %698 = vmatprep.subr.mxu0 0.0
        %699 = vmatpush2.xpose.msra.mxu0 0.0
        %700 = vmatprep.subr.mxu0 0.0
        %701 = vmatpush2.xpose.msra.mxu0 0.0
        %702 = vmatprep.subr.mxu0 0.0
        %703 = vmatpush2.xpose.msra.mxu0 0.0
        %704 = vmatprep.subr.mxu0 0.0
        %705 = vmatpush2.xpose.msra.mxu0 0.0
        %706 = vmatprep.subr.mxu0 0.0
        %707 = vmatpush2.xpose.msra.mxu0 0.0
        %708 = vmatprep.subr.mxu0 0.0
        %709 = vmatpush2.xpose.msra.mxu0 0.0
        %710 = vmatprep.subr.mxu0 0.0
        %711 = vmatpush2.xpose.msra.mxu0 0.0
        %712 = vmatprep.subr.mxu0 0.0
        %713 = vmatpush2.xpose.msra.mxu0 0.0
        %714 = vmatprep.subr.mxu0 0.0
        %715 = vmatpush2.xpose.msra.mxu0 0.0
        %716 = vmatprep.subr.mxu0 0.0
        %717 = vmatpush2.xpose.msra.mxu0 0.0
        %718 = vmatprep.mubr.f32.mxu0 0.0
        %v719 = vand.u32 %v311, 4294901760
        %v720 = vsub.f32 %v311, %v719
        %721 = vmatmul.mubr.f32.gmra.mxu0 %v720
        %v722 = vpop.f32.mrf.mxu0
        %v723 = vadd.f32 %v613, %v722
        %v724 = vpop.f32.mrf.mxu0
        %725 = vmatprep.mubr.f32.mxu0 0.0
        %v726 = vand.u32 %v314, 4294901760
        %v727 = vsub.f32 %v314, %v726
        %728 = vmatmul.mubr.f32.gmra.mxu0 %v727
        %v729 = vpop.f32.mrf.mxu0
        %v730 = vadd.f32 %v619, %v729
        %v731 = vpop.f32.mrf.mxu0
        %732 = vdwg.mxu0
        %733 = vmatprep.subr.mxu0 0.0
        %v734 = vand.u32 %v362, 4294901760
        %735 = vmatpush1.xpose.msra.mxu0 %v734
        %736 = vmatprep.subr.mxu0 0.0
        %v737 = vand.u32 %v359, 4294901760
        %738 = vmatpush1.xpose.msra.mxu0 %v737
        %739 = vmatprep.subr.mxu0 0.0
        %v740 = vand.u32 %v356, 4294901760
        %741 = vmatpush1.xpose.msra.mxu0 %v740
        %742 = vmatprep.subr.mxu0 0.0
        %v743 = vand.u32 %v353, 4294901760
        %744 = vmatpush1.xpose.msra.mxu0 %v743
        %745 = vmatprep.subr.mxu0 0.0
        %v746 = vand.u32 %v350, 4294901760
        %747 = vmatpush1.xpose.msra.mxu0 %v746
        %748 = vmatprep.subr.mxu0 0.0
        %v749 = vand.u32 %v347, 4294901760
        %750 = vmatpush1.xpose.msra.mxu0 %v749
        %751 = vmatprep.subr.mxu0 0.0
        %v752 = vand.u32 %v344, 4294901760
        %753 = vmatpush1.xpose.msra.mxu0 %v752
        %754 = vmatprep.subr.mxu0 0.0
        %v755 = vand.u32 %v341, 4294901760
        %756 = vmatpush1.xpose.msra.mxu0 %v755
        %757 = vmatprep.subr.mxu0 0.0
        %v758 = vand.u32 %v338, 4294901760
        %759 = vmatpush1.xpose.msra.mxu0 %v758
        %760 = vmatprep.subr.mxu0 0.0
        %v761 = vand.u32 %v335, 4294901760
        %762 = vmatpush1.xpose.msra.mxu0 %v761
        %763 = vmatprep.subr.mxu0 0.0
        %v764 = vand.u32 %v332, 4294901760
        %765 = vmatpush1.xpose.msra.mxu0 %v764
        %766 = vmatprep.subr.mxu0 0.0
        %v767 = vand.u32 %v329, 4294901760
        %768 = vmatpush1.xpose.msra.mxu0 %v767
        %769 = vmatprep.subr.mxu0 0.0
        %v770 = vand.u32 %v326, 4294901760
        %771 = vmatpush1.xpose.msra.mxu0 %v770
        %772 = vmatprep.subr.mxu0 0.0
        %v773 = vand.u32 %v323, 4294901760
        %774 = vmatpush1.xpose.msra.mxu0 %v773
        %775 = vmatprep.subr.mxu0 0.0
        %v776 = vand.u32 %v320, 4294901760
        %777 = vmatpush1.xpose.msra.mxu0 %v776
        %778 = vmatprep.subr.mxu0 0.0
        %v779 = vand.u32 %v317, 4294901760
        %780 = vmatpush1.xpose.msra.mxu0 %v779
        %781 = vmatprep.subr.mxu0 0.0
        %782 = vmatpush2.xpose.msra.mxu0 0.0
        %783 = vmatprep.subr.mxu0 0.0
        %784 = vmatpush2.xpose.msra.mxu0 0.0
        %785 = vmatprep.subr.mxu0 0.0
        %786 = vmatpush2.xpose.msra.mxu0 0.0
        %787 = vmatprep.subr.mxu0 0.0
        %788 = vmatpush2.xpose.msra.mxu0 0.0
        %789 = vmatprep.subr.mxu0 0.0
        %790 = vmatpush2.xpose.msra.mxu0 0.0
        %791 = vmatprep.subr.mxu0 0.0
        %792 = vmatpush2.xpose.msra.mxu0 0.0
        %793 = vmatprep.subr.mxu0 0.0
        %794 = vmatpush2.xpose.msra.mxu0 0.0
        %795 = vmatprep.subr.mxu0 0.0
        %796 = vmatpush2.xpose.msra.mxu0 0.0
        %797 = vmatprep.subr.mxu0 0.0
        %798 = vmatpush2.xpose.msra.mxu0 0.0
        %799 = vmatprep.subr.mxu0 0.0
        %800 = vmatpush2.xpose.msra.mxu0 0.0
        %801 = vmatprep.subr.mxu0 0.0
        %802 = vmatpush2.xpose.msra.mxu0 0.0
        %803 = vmatprep.subr.mxu0 0.0
        %804 = vmatpush2.xpose.msra.mxu0 0.0
        %805 = vmatprep.subr.mxu0 0.0
        %806 = vmatpush2.xpose.msra.mxu0 0.0
        %807 = vmatprep.subr.mxu0 0.0
        %808 = vmatpush2.xpose.msra.mxu0 0.0
        %809 = vmatprep.subr.mxu0 0.0
        %810 = vmatpush2.xpose.msra.mxu0 0.0
        %811 = vmatprep.subr.mxu0 0.0
        %812 = vmatpush2.xpose.msra.mxu0 0.0
        %813 = vmatprep.mubr.f32.mxu0 0.0
        %v814 = vand.u32 %v311, 4294901760
        %v815 = vsub.f32 %v311, %v814
        %v816 = vand.u32 %v815, 4294901760
        %817 = vmatmul.mubr.f32.gmra.mxu0 %v816
        %v818 = vpop.f32.mrf.mxu0
        %v819 = vadd.f32 %v723, %v818
        %v820 = vpop.f32.mrf.mxu0
        %821 = vmatprep.mubr.f32.mxu0 0.0
        %v822 = vand.u32 %v314, 4294901760
        %v823 = vsub.f32 %v314, %v822
        %v824 = vand.u32 %v823, 4294901760
        %825 = vmatmul.mubr.f32.gmra.mxu0 %v824
        %v826 = vpop.f32.mrf.mxu0
        %v827 = vadd.f32 %v730, %v826
        %v828 = vpop.f32.mrf.mxu0
        %829 = vdwg.mxu0
        %830 = vmatprep.subr.mxu0 0.0
        %v831 = vand.u32 %v362, 4294901760
        %v832 = vsub.f32 %v362, %v831
        %v833 = vand.u32 %v832, 4294901760
        %834 = vmatpush1.xpose.msra.mxu0 %v833
        %835 = vmatprep.subr.mxu0 0.0
        %v836 = vand.u32 %v359, 4294901760
        %v837 = vsub.f32 %v359, %v836
        %v838 = vand.u32 %v837, 4294901760
        %839 = vmatpush1.xpose.msra.mxu0 %v838
        %840 = vmatprep.subr.mxu0 0.0
        %v841 = vand.u32 %v356, 4294901760
        %v842 = vsub.f32 %v356, %v841
        %v843 = vand.u32 %v842, 4294901760
        %844 = vmatpush1.xpose.msra.mxu0 %v843
        %845 = vmatprep.subr.mxu0 0.0
        %v846 = vand.u32 %v353, 4294901760
        %v847 = vsub.f32 %v353, %v846
        %v848 = vand.u32 %v847, 4294901760
        %849 = vmatpush1.xpose.msra.mxu0 %v848
        %850 = vmatprep.subr.mxu0 0.0
        %v851 = vand.u32 %v350, 4294901760
        %v852 = vsub.f32 %v350, %v851
        %v853 = vand.u32 %v852, 4294901760
        %854 = vmatpush1.xpose.msra.mxu0 %v853
        %855 = vmatprep.subr.mxu0 0.0
        %v856 = vand.u32 %v347, 4294901760
        %v857 = vsub.f32 %v347, %v856
        %v858 = vand.u32 %v857, 4294901760
        %859 = vmatpush1.xpose.msra.mxu0 %v858
        %860 = vmatprep.subr.mxu0 0.0
        %v861 = vand.u32 %v344, 4294901760
        %v862 = vsub.f32 %v344, %v861
        %v863 = vand.u32 %v862, 4294901760
        %864 = vmatpush1.xpose.msra.mxu0 %v863
        %865 = vmatprep.subr.mxu0 0.0
        %v866 = vand.u32 %v341, 4294901760
        %v867 = vsub.f32 %v341, %v866
        %v868 = vand.u32 %v867, 4294901760
        %869 = vmatpush1.xpose.msra.mxu0 %v868
        %870 = vmatprep.subr.mxu0 0.0
        %v871 = vand.u32 %v338, 4294901760
        %v872 = vsub.f32 %v338, %v871
        %v873 = vand.u32 %v872, 4294901760
        %874 = vmatpush1.xpose.msra.mxu0 %v873
        %875 = vmatprep.subr.mxu0 0.0
        %v876 = vand.u32 %v335, 4294901760
        %v877 = vsub.f32 %v335, %v876
        %v878 = vand.u32 %v877, 4294901760
        %879 = vmatpush1.xpose.msra.mxu0 %v878
        %880 = vmatprep.subr.mxu0 0.0
        %v881 = vand.u32 %v332, 4294901760
        %v882 = vsub.f32 %v332, %v881
        %v883 = vand.u32 %v882, 4294901760
        %884 = vmatpush1.xpose.msra.mxu0 %v883
        %885 = vmatprep.subr.mxu0 0.0
        %v886 = vand.u32 %v329, 4294901760
        %v887 = vsub.f32 %v329, %v886
        %v888 = vand.u32 %v887, 4294901760
        %889 = vmatpush1.xpose.msra.mxu0 %v888
        %890 = vmatprep.subr.mxu0 0.0
        %v891 = vand.u32 %v326, 4294901760
        %v892 = vsub.f32 %v326, %v891
        %v893 = vand.u32 %v892, 4294901760
        %894 = vmatpush1.xpose.msra.mxu0 %v893
        %895 = vmatprep.subr.mxu0 0.0
        %v896 = vand.u32 %v323, 4294901760
        %v897 = vsub.f32 %v323, %v896
        %v898 = vand.u32 %v897, 4294901760
        %899 = vmatpush1.xpose.msra.mxu0 %v898
        %900 = vmatprep.subr.mxu0 0.0
        %v901 = vand.u32 %v320, 4294901760
        %v902 = vsub.f32 %v320, %v901
        %v903 = vand.u32 %v902, 4294901760
        %904 = vmatpush1.xpose.msra.mxu0 %v903
        %905 = vmatprep.subr.mxu0 0.0
        %v906 = vand.u32 %v317, 4294901760
        %v907 = vsub.f32 %v317, %v906
        %v908 = vand.u32 %v907, 4294901760
        %909 = vmatpush1.xpose.msra.mxu0 %v908
        %910 = vmatprep.subr.mxu0 0.0
        %911 = vmatpush2.xpose.msra.mxu0 0.0
        %912 = vmatprep.subr.mxu0 0.0
        %913 = vmatpush2.xpose.msra.mxu0 0.0
        %914 = vmatprep.subr.mxu0 0.0
        %915 = vmatpush2.xpose.msra.mxu0 0.0
        %916 = vmatprep.subr.mxu0 0.0
        %917 = vmatpush2.xpose.msra.mxu0 0.0
        %918 = vmatprep.subr.mxu0 0.0
        %919 = vmatpush2.xpose.msra.mxu0 0.0
        %920 = vmatprep.subr.mxu0 0.0
        %921 = vmatpush2.xpose.msra.mxu0 0.0
        %922 = vmatprep.subr.mxu0 0.0
        %923 = vmatpush2.xpose.msra.mxu0 0.0
        %924 = vmatprep.subr.mxu0 0.0
        %925 = vmatpush2.xpose.msra.mxu0 0.0
        %926 = vmatprep.subr.mxu0 0.0
        %927 = vmatpush2.xpose.msra.mxu0 0.0
        %928 = vmatprep.subr.mxu0 0.0
        %929 = vmatpush2.xpose.msra.mxu0 0.0
        %930 = vmatprep.subr.mxu0 0.0
        %931 = vmatpush2.xpose.msra.mxu0 0.0
        %932 = vmatprep.subr.mxu0 0.0
        %933 = vmatpush2.xpose.msra.mxu0 0.0
        %934 = vmatprep.subr.mxu0 0.0
        %935 = vmatpush2.xpose.msra.mxu0 0.0
        %936 = vmatprep.subr.mxu0 0.0
        %937 = vmatpush2.xpose.msra.mxu0 0.0
        %938 = vmatprep.subr.mxu0 0.0
        %939 = vmatpush2.xpose.msra.mxu0 0.0
        %940 = vmatprep.subr.mxu0 0.0
        %941 = vmatpush2.xpose.msra.mxu0 0.0
        %942 = vmatprep.mubr.f32.mxu0 0.0
        %v943 = vand.u32 %v311, 4294901760
        %944 = vmatmul.mubr.f32.gmra.mxu0 %v943
        %v945 = vpop.f32.mrf.mxu0
        %v946 = vadd.f32 %v819, %v945
        %v947 = vpop.f32.mrf.mxu0
        %948 = vmatprep.mubr.f32.mxu0 0.0
        %v949 = vand.u32 %v314, 4294901760
        %950 = vmatmul.mubr.f32.gmra.mxu0 %v949
        %v951 = vpop.f32.mrf.mxu0
        %v952 = vadd.f32 %v827, %v951
        %v953 = vpop.f32.mrf.mxu0
        %954 = vdwg.mxu0
        %955 = vmatprep.subr.mxu0 0.0
        %v956 = vand.u32 %v362, 4294901760
        %957 = vmatpush1.xpose.msra.mxu0 %v956
        %958 = vmatprep.subr.mxu0 0.0
        %v959 = vand.u32 %v359, 4294901760
        %960 = vmatpush1.xpose.msra.mxu0 %v959
        %961 = vmatprep.subr.mxu0 0.0
        %v962 = vand.u32 %v356, 4294901760
        %963 = vmatpush1.xpose.msra.mxu0 %v962
        %964 = vmatprep.subr.mxu0 0.0
        %v965 = vand.u32 %v353, 4294901760
        %966 = vmatpush1.xpose.msra.mxu0 %v965
        %967 = vmatprep.subr.mxu0 0.0
        %v968 = vand.u32 %v350, 4294901760
        %969 = vmatpush1.xpose.msra.mxu0 %v968
        %970 = vmatprep.subr.mxu0 0.0
        %v971 = vand.u32 %v347, 4294901760
        %972 = vmatpush1.xpose.msra.mxu0 %v971
        %973 = vmatprep.subr.mxu0 0.0
        %v974 = vand.u32 %v344, 4294901760
        %975 = vmatpush1.xpose.msra.mxu0 %v974
        %976 = vmatprep.subr.mxu0 0.0
        %v977 = vand.u32 %v341, 4294901760
        %978 = vmatpush1.xpose.msra.mxu0 %v977
        %979 = vmatprep.subr.mxu0 0.0
        %v980 = vand.u32 %v338, 4294901760
        %981 = vmatpush1.xpose.msra.mxu0 %v980
        %982 = vmatprep.subr.mxu0 0.0
        %v983 = vand.u32 %v335, 4294901760
        %984 = vmatpush1.xpose.msra.mxu0 %v983
        %985 = vmatprep.subr.mxu0 0.0
        %v986 = vand.u32 %v332, 4294901760
        %987 = vmatpush1.xpose.msra.mxu0 %v986
        %988 = vmatprep.subr.mxu0 0.0
        %v989 = vand.u32 %v329, 4294901760
        %990 = vmatpush1.xpose.msra.mxu0 %v989
        %991 = vmatprep.subr.mxu0 0.0
        %v992 = vand.u32 %v326, 4294901760
        %993 = vmatpush1.xpose.msra.mxu0 %v992
        %994 = vmatprep.subr.mxu0 0.0
        %v995 = vand.u32 %v323, 4294901760
        %996 = vmatpush1.xpose.msra.mxu0 %v995
        %997 = vmatprep.subr.mxu0 0.0
        %v998 = vand.u32 %v320, 4294901760
        %999 = vmatpush1.xpose.msra.mxu0 %v998
        %1000 = vmatprep.subr.mxu0 0.0
        %v1001 = vand.u32 %v317, 4294901760
        %1002 = vmatpush1.xpose.msra.mxu0 %v1001
        %1003 = vmatprep.subr.mxu0 0.0
        %1004 = vmatpush2.xpose.msra.mxu0 0.0
        %1005 = vmatprep.subr.mxu0 0.0
        %1006 = vmatpush2.xpose.msra.mxu0 0.0
        %1007 = vmatprep.subr.mxu0 0.0
        %1008 = vmatpush2.xpose.msra.mxu0 0.0
        %1009 = vmatprep.subr.mxu0 0.0
        %1010 = vmatpush2.xpose.msra.mxu0 0.0
        %1011 = vmatprep.subr.mxu0 0.0
        %1012 = vmatpush2.xpose.msra.mxu0 0.0
        %1013 = vmatprep.subr.mxu0 0.0
        %1014 = vmatpush2.xpose.msra.mxu0 0.0
        %1015 = vmatprep.subr.mxu0 0.0
        %1016 = vmatpush2.xpose.msra.mxu0 0.0
        %1017 = vmatprep.subr.mxu0 0.0
        %1018 = vmatpush2.xpose.msra.mxu0 0.0
        %1019 = vmatprep.subr.mxu0 0.0
        %1020 = vmatpush2.xpose.msra.mxu0 0.0
        %1021 = vmatprep.subr.mxu0 0.0
        %1022 = vmatpush2.xpose.msra.mxu0 0.0
        %1023 = vmatprep.subr.mxu0 0.0
        %1024 = vmatpush2.xpose.msra.mxu0 0.0
        %1025 = vmatprep.subr.mxu0 0.0
        %1026 = vmatpush2.xpose.msra.mxu0 0.0
        %1027 = vmatprep.subr.mxu0 0.0
        %1028 = vmatpush2.xpose.msra.mxu0 0.0
        %1029 = vmatprep.subr.mxu0 0.0
        %1030 = vmatpush2.xpose.msra.mxu0 0.0
        %1031 = vmatprep.subr.mxu0 0.0
        %1032 = vmatpush2.xpose.msra.mxu0 0.0
        %1033 = vmatprep.subr.mxu0 0.0
        %1034 = vmatpush2.xpose.msra.mxu0 0.0
        %1035 = vmatprep.mubr.f32.mxu0 0.0
        %v1036 = vand.u32 %v311, 4294901760
        %1037 = vmatmul.mubr.f32.gmra.mxu0 %v1036
        %v1038 = vpop.f32.mrf.mxu0
        %v1039 = vadd.f32 %v946, %v1038
        %v1040 = vpop.f32.mrf.mxu0
        %1041 = vmatprep.mubr.f32.mxu0 0.0
        %v1042 = vand.u32 %v314, 4294901760
        %1043 = vmatmul.mubr.f32.gmra.mxu0 %v1042
        %v1044 = vpop.f32.mrf.mxu0
        %v1045 = vadd.f32 %v952, %v1044
        %v1046 = vpop.f32.mrf.mxu0
        %1047 = vdwg.mxu0
        %v1048 = vmax.f32 %v1039, 0.0
        %v1049 = vmax.f32 %v1045, 0.0
        %v1050 = vld [vmem:[%s3] sm:$0xff]
        %v1051 = vld [vmem:[%s4] sm:$0xff]
        %1053 = vset.pattern.permute.xlu0 0
        %1054 = vperm.xlu0 %1053, %v1051
        %v1055 = vpop.permute.xlu0 %1054
        %vm1057 = vcmask 130048
        %v1059 = vsel %vm1057, %v1050, 0
        %1061 = vmatprep.subr.mxu0 0.0
        %1062 = vmatpush1.msra.mxu0 0.0
        %1063 = vmatprep.subr.mxu0 0.0
        %1064 = vmatpush1.msra.mxu0 0.0
        %1065 = vmatprep.subr.mxu0 0.0
        %1066 = vmatpush1.msra.mxu0 0.0
        %1067 = vmatprep.subr.mxu0 0.0
        %1068 = vmatpush1.msra.mxu0 0.0
        %1069 = vmatprep.subr.mxu0 0.0
        %1070 = vmatpush1.msra.mxu0 0.0
        %1071 = vmatprep.subr.mxu0 0.0
        %1072 = vmatpush1.msra.mxu0 0.0
        %1073 = vmatprep.subr.mxu0 0.0
        %1074 = vmatpush1.msra.mxu0 0.0
        %1075 = vmatprep.subr.mxu0 0.0
        %1076 = vmatpush1.msra.mxu0 0.0
        %1077 = vmatprep.subr.mxu0 0.0
        %1078 = vmatpush1.msra.mxu0 0.0
        %1079 = vmatprep.subr.mxu0 0.0
        %1080 = vmatpush1.msra.mxu0 0.0
        %1081 = vmatprep.subr.mxu0 0.0
        %1082 = vmatpush1.msra.mxu0 0.0
        %1083 = vmatprep.subr.mxu0 0.0
        %1084 = vmatpush1.msra.mxu0 0.0
        %1085 = vmatprep.subr.mxu0 0.0
        %1086 = vmatpush1.msra.mxu0 0.0
        %1087 = vmatprep.subr.mxu0 0.0
        %1088 = vmatpush1.msra.mxu0 0.0
        %1089 = vmatprep.subr.mxu0 0.0
        %v1090 = vand.u32 %v1049, 4294901760
        %1091 = vmatpush1.msra.mxu0 %v1090
        %1092 = vmatprep.subr.mxu0 0.0
        %v1093 = vand.u32 %v1048, 4294901760
        %1094 = vmatpush1.msra.mxu0 %v1093
        %1095 = vmatprep.subr.mxu0 0.0
        %1096 = vmatpush2.msra.mxu0 0.0
        %1097 = vmatprep.subr.mxu0 0.0
        %1098 = vmatpush2.msra.mxu0 0.0
        %1099 = vmatprep.subr.mxu0 0.0
        %1100 = vmatpush2.msra.mxu0 0.0
        %1101 = vmatprep.subr.mxu0 0.0
        %1102 = vmatpush2.msra.mxu0 0.0
        %1103 = vmatprep.subr.mxu0 0.0
        %1104 = vmatpush2.msra.mxu0 0.0
        %1105 = vmatprep.subr.mxu0 0.0
        %1106 = vmatpush2.msra.mxu0 0.0
        %1107 = vmatprep.subr.mxu0 0.0
        %1108 = vmatpush2.msra.mxu0 0.0
        %1109 = vmatprep.subr.mxu0 0.0
        %1110 = vmatpush2.msra.mxu0 0.0
        %1111 = vmatprep.subr.mxu0 0.0
        %1112 = vmatpush2.msra.mxu0 0.0
        %1113 = vmatprep.subr.mxu0 0.0
        %1114 = vmatpush2.msra.mxu0 0.0
        %1115 = vmatprep.subr.mxu0 0.0
        %1116 = vmatpush2.msra.mxu0 0.0
        %1117 = vmatprep.subr.mxu0 0.0
        %1118 = vmatpush2.msra.mxu0 0.0
        %1119 = vmatprep.subr.mxu0 0.0
        %1120 = vmatpush2.msra.mxu0 0.0
        %1121 = vmatprep.subr.mxu0 0.0
        %1122 = vmatpush2.msra.mxu0 0.0
        %1123 = vmatprep.subr.mxu0 0.0
        %1124 = vmatpush2.msra.mxu0 0.0
        %1125 = vmatprep.subr.mxu0 0.0
        %1126 = vmatpush2.msra.mxu0 0.0
        %1127 = vmatprep.mubr.f32.mxu0 0.0
        %v1128 = vand.u32 %v1059, 4294901760
        %v1129 = vsub.f32 %v1059, %v1128
        %v1130 = vand.u32 %v1129, 4294901760
        %v1131 = vsub.f32 %v1129, %v1130
        %v1132 = vand.u32 %v1131, 4294901760
        %1133 = vmatmul.mubr.f32.gmra.mxu0 %v1132
        %v1134 = vpop.f32.mrf.mxu0
        %v1135 = vadd.f32 %v1055, %v1134
        %v1136 = vpop.f32.mrf.mxu0
        %1137 = vdwg.mxu0
        %1138 = vmatprep.subr.mxu0 0.0
        %1139 = vmatpush1.msra.mxu0 0.0
        %1140 = vmatprep.subr.mxu0 0.0
        %1141 = vmatpush1.msra.mxu0 0.0
        %1142 = vmatprep.subr.mxu0 0.0
        %1143 = vmatpush1.msra.mxu0 0.0
        %1144 = vmatprep.subr.mxu0 0.0
        %1145 = vmatpush1.msra.mxu0 0.0
        %1146 = vmatprep.subr.mxu0 0.0
        %1147 = vmatpush1.msra.mxu0 0.0
        %1148 = vmatprep.subr.mxu0 0.0
        %1149 = vmatpush1.msra.mxu0 0.0
        %1150 = vmatprep.subr.mxu0 0.0
        %1151 = vmatpush1.msra.mxu0 0.0
        %1152 = vmatprep.subr.mxu0 0.0
        %1153 = vmatpush1.msra.mxu0 0.0
        %1154 = vmatprep.subr.mxu0 0.0
        %1155 = vmatpush1.msra.mxu0 0.0
        %1156 = vmatprep.subr.mxu0 0.0
        %1157 = vmatpush1.msra.mxu0 0.0
        %1158 = vmatprep.subr.mxu0 0.0
        %1159 = vmatpush1.msra.mxu0 0.0
        %1160 = vmatprep.subr.mxu0 0.0
        %1161 = vmatpush1.msra.mxu0 0.0
        %1162 = vmatprep.subr.mxu0 0.0
        %1163 = vmatpush1.msra.mxu0 0.0
        %1164 = vmatprep.subr.mxu0 0.0
        %1165 = vmatpush1.msra.mxu0 0.0
        %1166 = vmatprep.subr.mxu0 0.0
        %v1167 = vand.u32 %v1049, 4294901760
        %v1168 = vsub.f32 %v1049, %v1167
        %v1169 = vand.u32 %v1168, 4294901760
        %v1170 = vsub.f32 %v1168, %v1169
        %v1171 = vand.u32 %v1170, 4294901760
        %1172 = vmatpush1.msra.mxu0 %v1171
        %1173 = vmatprep.subr.mxu0 0.0
        %v1174 = vand.u32 %v1048, 4294901760
        %v1175 = vsub.f32 %v1048, %v1174
        %v1176 = vand.u32 %v1175, 4294901760
        %v1177 = vsub.f32 %v1175, %v1176
        %v1178 = vand.u32 %v1177, 4294901760
        %1179 = vmatpush1.msra.mxu0 %v1178
        %1180 = vmatprep.subr.mxu0 0.0
        %1181 = vmatpush2.msra.mxu0 0.0
        %1182 = vmatprep.subr.mxu0 0.0
        %1183 = vmatpush2.msra.mxu0 0.0
        %1184 = vmatprep.subr.mxu0 0.0
        %1185 = vmatpush2.msra.mxu0 0.0
        %1186 = vmatprep.subr.mxu0 0.0
        %1187 = vmatpush2.msra.mxu0 0.0
        %1188 = vmatprep.subr.mxu0 0.0
        %1189 = vmatpush2.msra.mxu0 0.0
        %1190 = vmatprep.subr.mxu0 0.0
        %1191 = vmatpush2.msra.mxu0 0.0
        %1192 = vmatprep.subr.mxu0 0.0
        %1193 = vmatpush2.msra.mxu0 0.0
        %1194 = vmatprep.subr.mxu0 0.0
        %1195 = vmatpush2.msra.mxu0 0.0
        %1196 = vmatprep.subr.mxu0 0.0
        %1197 = vmatpush2.msra.mxu0 0.0
        %1198 = vmatprep.subr.mxu0 0.0
        %1199 = vmatpush2.msra.mxu0 0.0
        %1200 = vmatprep.subr.mxu0 0.0
        %1201 = vmatpush2.msra.mxu0 0.0
        %1202 = vmatprep.subr.mxu0 0.0
        %1203 = vmatpush2.msra.mxu0 0.0
        %1204 = vmatprep.subr.mxu0 0.0
        %1205 = vmatpush2.msra.mxu0 0.0
        %1206 = vmatprep.subr.mxu0 0.0
        %1207 = vmatpush2.msra.mxu0 0.0
        %1208 = vmatprep.subr.mxu0 0.0
        %1209 = vmatpush2.msra.mxu0 0.0
        %1210 = vmatprep.subr.mxu0 0.0
        %1211 = vmatpush2.msra.mxu0 0.0
        %1212 = vmatprep.mubr.f32.mxu0 0.0
        %v1213 = vand.u32 %v1059, 4294901760
        %1214 = vmatmul.mubr.f32.gmra.mxu0 %v1213
        %v1215 = vpop.f32.mrf.mxu0
        %v1216 = vadd.f32 %v1135, %v1215
        %v1217 = vpop.f32.mrf.mxu0
        %1218 = vdwg.mxu0
        %1219 = vmatprep.subr.mxu0 0.0
        %1220 = vmatpush1.msra.mxu0 0.0
        %1221 = vmatprep.subr.mxu0 0.0
        %1222 = vmatpush1.msra.mxu0 0.0
        %1223 = vmatprep.subr.mxu0 0.0
        %1224 = vmatpush1.msra.mxu0 0.0
        %1225 = vmatprep.subr.mxu0 0.0
        %1226 = vmatpush1.msra.mxu0 0.0
        %1227 = vmatprep.subr.mxu0 0.0
        %1228 = vmatpush1.msra.mxu0 0.0
        %1229 = vmatprep.subr.mxu0 0.0
        %1230 = vmatpush1.msra.mxu0 0.0
        %1231 = vmatprep.subr.mxu0 0.0
        %1232 = vmatpush1.msra.mxu0 0.0
        %1233 = vmatprep.subr.mxu0 0.0
        %1234 = vmatpush1.msra.mxu0 0.0
        %1235 = vmatprep.subr.mxu0 0.0
        %1236 = vmatpush1.msra.mxu0 0.0
        %1237 = vmatprep.subr.mxu0 0.0
        %1238 = vmatpush1.msra.mxu0 0.0
        %1239 = vmatprep.subr.mxu0 0.0
        %1240 = vmatpush1.msra.mxu0 0.0
        %1241 = vmatprep.subr.mxu0 0.0
        %1242 = vmatpush1.msra.mxu0 0.0
        %1243 = vmatprep.subr.mxu0 0.0
        %1244 = vmatpush1.msra.mxu0 0.0
        %1245 = vmatprep.subr.mxu0 0.0
        %1246 = vmatpush1.msra.mxu0 0.0
        %1247 = vmatprep.subr.mxu0 0.0
        %v1248 = vand.u32 %v1049, 4294901760
        %v1249 = vsub.f32 %v1049, %v1248
        %1250 = vmatpush1.msra.mxu0 %v1249
        %1251 = vmatprep.subr.mxu0 0.0
        %v1252 = vand.u32 %v1048, 4294901760
        %v1253 = vsub.f32 %v1048, %v1252
        %1254 = vmatpush1.msra.mxu0 %v1253
        %1255 = vmatprep.subr.mxu0 0.0
        %1256 = vmatpush2.msra.mxu0 0.0
        %1257 = vmatprep.subr.mxu0 0.0
        %1258 = vmatpush2.msra.mxu0 0.0
        %1259 = vmatprep.subr.mxu0 0.0
        %1260 = vmatpush2.msra.mxu0 0.0
        %1261 = vmatprep.subr.mxu0 0.0
        %1262 = vmatpush2.msra.mxu0 0.0
        %1263 = vmatprep.subr.mxu0 0.0
        %1264 = vmatpush2.msra.mxu0 0.0
        %1265 = vmatprep.subr.mxu0 0.0
        %1266 = vmatpush2.msra.mxu0 0.0
        %1267 = vmatprep.subr.mxu0 0.0
        %1268 = vmatpush2.msra.mxu0 0.0
        %1269 = vmatprep.subr.mxu0 0.0
        %1270 = vmatpush2.msra.mxu0 0.0
        %1271 = vmatprep.subr.mxu0 0.0
        %1272 = vmatpush2.msra.mxu0 0.0
        %1273 = vmatprep.subr.mxu0 0.0
        %1274 = vmatpush2.msra.mxu0 0.0
        %1275 = vmatprep.subr.mxu0 0.0
        %1276 = vmatpush2.msra.mxu0 0.0
        %1277 = vmatprep.subr.mxu0 0.0
        %1278 = vmatpush2.msra.mxu0 0.0
        %1279 = vmatprep.subr.mxu0 0.0
        %1280 = vmatpush2.msra.mxu0 0.0
        %1281 = vmatprep.subr.mxu0 0.0
        %1282 = vmatpush2.msra.mxu0 0.0
        %1283 = vmatprep.subr.mxu0 0.0
        %1284 = vmatpush2.msra.mxu0 0.0
        %1285 = vmatprep.subr.mxu0 0.0
        %1286 = vmatpush2.msra.mxu0 0.0
        %1287 = vmatprep.mubr.f32.mxu0 0.0
        %v1288 = vand.u32 %v1059, 4294901760
        %v1289 = vsub.f32 %v1059, %v1288
        %1290 = vmatmul.mubr.f32.gmra.mxu0 %v1289
        %v1291 = vpop.f32.mrf.mxu0
        %v1292 = vadd.f32 %v1216, %v1291
        %v1293 = vpop.f32.mrf.mxu0
        %1294 = vdwg.mxu0
        %1295 = vmatprep.subr.mxu0 0.0
        %1296 = vmatpush1.msra.mxu0 0.0
        %1297 = vmatprep.subr.mxu0 0.0
        %1298 = vmatpush1.msra.mxu0 0.0
        %1299 = vmatprep.subr.mxu0 0.0
        %1300 = vmatpush1.msra.mxu0 0.0
        %1301 = vmatprep.subr.mxu0 0.0
        %1302 = vmatpush1.msra.mxu0 0.0
        %1303 = vmatprep.subr.mxu0 0.0
        %1304 = vmatpush1.msra.mxu0 0.0
        %1305 = vmatprep.subr.mxu0 0.0
        %1306 = vmatpush1.msra.mxu0 0.0
        %1307 = vmatprep.subr.mxu0 0.0
        %1308 = vmatpush1.msra.mxu0 0.0
        %1309 = vmatprep.subr.mxu0 0.0
        %1310 = vmatpush1.msra.mxu0 0.0
        %1311 = vmatprep.subr.mxu0 0.0
        %1312 = vmatpush1.msra.mxu0 0.0
        %1313 = vmatprep.subr.mxu0 0.0
        %1314 = vmatpush1.msra.mxu0 0.0
        %1315 = vmatprep.subr.mxu0 0.0
        %1316 = vmatpush1.msra.mxu0 0.0
        %1317 = vmatprep.subr.mxu0 0.0
        %1318 = vmatpush1.msra.mxu0 0.0
        %1319 = vmatprep.subr.mxu0 0.0
        %1320 = vmatpush1.msra.mxu0 0.0
        %1321 = vmatprep.subr.mxu0 0.0
        %1322 = vmatpush1.msra.mxu0 0.0
        %1323 = vmatprep.subr.mxu0 0.0
        %v1324 = vand.u32 %v1049, 4294901760
        %1325 = vmatpush1.msra.mxu0 %v1324
        %1326 = vmatprep.subr.mxu0 0.0
        %v1327 = vand.u32 %v1048, 4294901760
        %1328 = vmatpush1.msra.mxu0 %v1327
        %1329 = vmatprep.subr.mxu0 0.0
        %1330 = vmatpush2.msra.mxu0 0.0
        %1331 = vmatprep.subr.mxu0 0.0
        %1332 = vmatpush2.msra.mxu0 0.0
        %1333 = vmatprep.subr.mxu0 0.0
        %1334 = vmatpush2.msra.mxu0 0.0
        %1335 = vmatprep.subr.mxu0 0.0
        %1336 = vmatpush2.msra.mxu0 0.0
        %1337 = vmatprep.subr.mxu0 0.0
        %1338 = vmatpush2.msra.mxu0 0.0
        %1339 = vmatprep.subr.mxu0 0.0
        %1340 = vmatpush2.msra.mxu0 0.0
        %1341 = vmatprep.subr.mxu0 0.0
        %1342 = vmatpush2.msra.mxu0 0.0
        %1343 = vmatprep.subr.mxu0 0.0
        %1344 = vmatpush2.msra.mxu0 0.0
        %1345 = vmatprep.subr.mxu0 0.0
        %1346 = vmatpush2.msra.mxu0 0.0
        %1347 = vmatprep.subr.mxu0 0.0
        %1348 = vmatpush2.msra.mxu0 0.0
        %1349 = vmatprep.subr.mxu0 0.0
        %1350 = vmatpush2.msra.mxu0 0.0
        %1351 = vmatprep.subr.mxu0 0.0
        %1352 = vmatpush2.msra.mxu0 0.0
        %1353 = vmatprep.subr.mxu0 0.0
        %1354 = vmatpush2.msra.mxu0 0.0
        %1355 = vmatprep.subr.mxu0 0.0
        %1356 = vmatpush2.msra.mxu0 0.0
        %1357 = vmatprep.subr.mxu0 0.0
        %1358 = vmatpush2.msra.mxu0 0.0
        %1359 = vmatprep.subr.mxu0 0.0
        %1360 = vmatpush2.msra.mxu0 0.0
        %1361 = vmatprep.mubr.f32.mxu0 0.0
        %v1362 = vand.u32 %v1059, 4294901760
        %v1363 = vsub.f32 %v1059, %v1362
        %v1364 = vand.u32 %v1363, 4294901760
        %1365 = vmatmul.mubr.f32.gmra.mxu0 %v1364
        %v1366 = vpop.f32.mrf.mxu0
        %v1367 = vadd.f32 %v1292, %v1366
        %v1368 = vpop.f32.mrf.mxu0
        %1369 = vdwg.mxu0
        %1370 = vmatprep.subr.mxu0 0.0
        %1371 = vmatpush1.msra.mxu0 0.0
        %1372 = vmatprep.subr.mxu0 0.0
        %1373 = vmatpush1.msra.mxu0 0.0
        %1374 = vmatprep.subr.mxu0 0.0
        %1375 = vmatpush1.msra.mxu0 0.0
        %1376 = vmatprep.subr.mxu0 0.0
        %1377 = vmatpush1.msra.mxu0 0.0
        %1378 = vmatprep.subr.mxu0 0.0
        %1379 = vmatpush1.msra.mxu0 0.0
        %1380 = vmatprep.subr.mxu0 0.0
        %1381 = vmatpush1.msra.mxu0 0.0
        %1382 = vmatprep.subr.mxu0 0.0
        %1383 = vmatpush1.msra.mxu0 0.0
        %1384 = vmatprep.subr.mxu0 0.0
        %1385 = vmatpush1.msra.mxu0 0.0
        %1386 = vmatprep.subr.mxu0 0.0
        %1387 = vmatpush1.msra.mxu0 0.0
        %1388 = vmatprep.subr.mxu0 0.0
        %1389 = vmatpush1.msra.mxu0 0.0
        %1390 = vmatprep.subr.mxu0 0.0
        %1391 = vmatpush1.msra.mxu0 0.0
        %1392 = vmatprep.subr.mxu0 0.0
        %1393 = vmatpush1.msra.mxu0 0.0
        %1394 = vmatprep.subr.mxu0 0.0
        %1395 = vmatpush1.msra.mxu0 0.0
        %1396 = vmatprep.subr.mxu0 0.0
        %1397 = vmatpush1.msra.mxu0 0.0
        %1398 = vmatprep.subr.mxu0 0.0
        %v1399 = vand.u32 %v1049, 4294901760
        %v1400 = vsub.f32 %v1049, %v1399
        %v1401 = vand.u32 %v1400, 4294901760
        %1402 = vmatpush1.msra.mxu0 %v1401
        %1403 = vmatprep.subr.mxu0 0.0
        %v1404 = vand.u32 %v1048, 4294901760
        %v1405 = vsub.f32 %v1048, %v1404
        %v1406 = vand.u32 %v1405, 4294901760
        %1407 = vmatpush1.msra.mxu0 %v1406
        %1408 = vmatprep.subr.mxu0 0.0
        %1409 = vmatpush2.msra.mxu0 0.0
        %1410 = vmatprep.subr.mxu0 0.0
        %1411 = vmatpush2.msra.mxu0 0.0
        %1412 = vmatprep.subr.mxu0 0.0
        %1413 = vmatpush2.msra.mxu0 0.0
        %1414 = vmatprep.subr.mxu0 0.0
        %1415 = vmatpush2.msra.mxu0 0.0
        %1416 = vmatprep.subr.mxu0 0.0
        %1417 = vmatpush2.msra.mxu0 0.0
        %1418 = vmatprep.subr.mxu0 0.0
        %1419 = vmatpush2.msra.mxu0 0.0
        %1420 = vmatprep.subr.mxu0 0.0
        %1421 = vmatpush2.msra.mxu0 0.0
        %1422 = vmatprep.subr.mxu0 0.0
        %1423 = vmatpush2.msra.mxu0 0.0
        %1424 = vmatprep.subr.mxu0 0.0
        %1425 = vmatpush2.msra.mxu0 0.0
        %1426 = vmatprep.subr.mxu0 0.0
        %1427 = vmatpush2.msra.mxu0 0.0
        %1428 = vmatprep.subr.mxu0 0.0
        %1429 = vmatpush2.msra.mxu0 0.0
        %1430 = vmatprep.subr.mxu0 0.0
        %1431 = vmatpush2.msra.mxu0 0.0
        %1432 = vmatprep.subr.mxu0 0.0
        %1433 = vmatpush2.msra.mxu0 0.0
        %1434 = vmatprep.subr.mxu0 0.0
        %1435 = vmatpush2.msra.mxu0 0.0
        %1436 = vmatprep.subr.mxu0 0.0
        %1437 = vmatpush2.msra.mxu0 0.0
        %1438 = vmatprep.subr.mxu0 0.0
        %1439 = vmatpush2.msra.mxu0 0.0
        %1440 = vmatprep.mubr.f32.mxu0 0.0
        %v1441 = vand.u32 %v1059, 4294901760
        %1442 = vmatmul.mubr.f32.gmra.mxu0 %v1441
        %v1443 = vpop.f32.mrf.mxu0
        %v1444 = vadd.f32 %v1367, %v1443
        %v1445 = vpop.f32.mrf.mxu0
        %1446 = vdwg.mxu0
        %1447 = vmatprep.subr.mxu0 0.0
        %1448 = vmatpush1.msra.mxu0 0.0
        %1449 = vmatprep.subr.mxu0 0.0
        %1450 = vmatpush1.msra.mxu0 0.0
        %1451 = vmatprep.subr.mxu0 0.0
        %1452 = vmatpush1.msra.mxu0 0.0
        %1453 = vmatprep.subr.mxu0 0.0
        %1454 = vmatpush1.msra.mxu0 0.0
        %1455 = vmatprep.subr.mxu0 0.0
        %1456 = vmatpush1.msra.mxu0 0.0
        %1457 = vmatprep.subr.mxu0 0.0
        %1458 = vmatpush1.msra.mxu0 0.0
        %1459 = vmatprep.subr.mxu0 0.0
        %1460 = vmatpush1.msra.mxu0 0.0
        %1461 = vmatprep.subr.mxu0 0.0
        %1462 = vmatpush1.msra.mxu0 0.0
        %1463 = vmatprep.subr.mxu0 0.0
        %1464 = vmatpush1.msra.mxu0 0.0
        %1465 = vmatprep.subr.mxu0 0.0
        %1466 = vmatpush1.msra.mxu0 0.0
        %1467 = vmatprep.subr.mxu0 0.0
        %1468 = vmatpush1.msra.mxu0 0.0
        %1469 = vmatprep.subr.mxu0 0.0
        %1470 = vmatpush1.msra.mxu0 0.0
        %1471 = vmatprep.subr.mxu0 0.0
        %1472 = vmatpush1.msra.mxu0 0.0
        %1473 = vmatprep.subr.mxu0 0.0
        %1474 = vmatpush1.msra.mxu0 0.0
        %1475 = vmatprep.subr.mxu0 0.0
        %v1476 = vand.u32 %v1049, 4294901760
        %1477 = vmatpush1.msra.mxu0 %v1476
        %1478 = vmatprep.subr.mxu0 0.0
        %v1479 = vand.u32 %v1048, 4294901760
        %1480 = vmatpush1.msra.mxu0 %v1479
        %1481 = vmatprep.subr.mxu0 0.0
        %1482 = vmatpush2.msra.mxu0 0.0
        %1483 = vmatprep.subr.mxu0 0.0
        %1484 = vmatpush2.msra.mxu0 0.0
        %1485 = vmatprep.subr.mxu0 0.0
        %1486 = vmatpush2.msra.mxu0 0.0
        %1487 = vmatprep.subr.mxu0 0.0
        %1488 = vmatpush2.msra.mxu0 0.0
        %1489 = vmatprep.subr.mxu0 0.0
        %1490 = vmatpush2.msra.mxu0 0.0
        %1491 = vmatprep.subr.mxu0 0.0
        %1492 = vmatpush2.msra.mxu0 0.0
        %1493 = vmatprep.subr.mxu0 0.0
        %1494 = vmatpush2.msra.mxu0 0.0
        %1495 = vmatprep.subr.mxu0 0.0
        %1496 = vmatpush2.msra.mxu0 0.0
        %1497 = vmatprep.subr.mxu0 0.0
        %1498 = vmatpush2.msra.mxu0 0.0
        %1499 = vmatprep.subr.mxu0 0.0
        %1500 = vmatpush2.msra.mxu0 0.0
        %1501 = vmatprep.subr.mxu0 0.0
        %1502 = vmatpush2.msra.mxu0 0.0
        %1503 = vmatprep.subr.mxu0 0.0
        %1504 = vmatpush2.msra.mxu0 0.0
        %1505 = vmatprep.subr.mxu0 0.0
        %1506 = vmatpush2.msra.mxu0 0.0
        %1507 = vmatprep.subr.mxu0 0.0
        %1508 = vmatpush2.msra.mxu0 0.0
        %1509 = vmatprep.subr.mxu0 0.0
        %1510 = vmatpush2.msra.mxu0 0.0
        %1511 = vmatprep.subr.mxu0 0.0
        %1512 = vmatpush2.msra.mxu0 0.0
        %1513 = vmatprep.mubr.f32.mxu0 0.0
        %v1514 = vand.u32 %v1059, 4294901760
        %1515 = vmatmul.mubr.f32.gmra.mxu0 %v1514
        %v1516 = vpop.f32.mrf.mxu0
        %v1517 = vadd.f32 %v1444, %v1516
        %v1518 = vpop.f32.mrf.mxu0
        %1519 = vdwg.mxu0
        %v1520 = vmax.f32 %v1517, 0.0
        %v1521 = vld [vmem:[%s5] sm:$0x3]
        %v1522 = vld [vmem:[%s6] sm:$0x3]
        %1524 = vset.pattern.permute.xlu0 0
        %1525 = vperm.xlu0 %1524, %v1522
        %v1526 = vpop.permute.xlu0 %1525
        %vm1528 = vcmask 64512
        %v1530 = vsel %vm1528, %v1521, 0
        %1532 = vmatprep.subr.mxu0 0.0
        %1533 = vmatpush1.msra.mxu0 0.0
        %1534 = vmatprep.subr.mxu0 0.0
        %1535 = vmatpush1.msra.mxu0 0.0
        %1536 = vmatprep.subr.mxu0 0.0
        %1537 = vmatpush1.msra.mxu0 0.0
        %1538 = vmatprep.subr.mxu0 0.0
        %1539 = vmatpush1.msra.mxu0 0.0
        %1540 = vmatprep.subr.mxu0 0.0
        %1541 = vmatpush1.msra.mxu0 0.0
        %1542 = vmatprep.subr.mxu0 0.0
        %1543 = vmatpush1.msra.mxu0 0.0
        %1544 = vmatprep.subr.mxu0 0.0
        %1545 = vmatpush1.msra.mxu0 0.0
        %1546 = vmatprep.subr.mxu0 0.0
        %1547 = vmatpush1.msra.mxu0 0.0
        %1548 = vmatprep.subr.mxu0 0.0
        %1549 = vmatpush1.msra.mxu0 0.0
        %1550 = vmatprep.subr.mxu0 0.0
        %1551 = vmatpush1.msra.mxu0 0.0
        %1552 = vmatprep.subr.mxu0 0.0
        %1553 = vmatpush1.msra.mxu0 0.0
        %1554 = vmatprep.subr.mxu0 0.0
        %1555 = vmatpush1.msra.mxu0 0.0
        %1556 = vmatprep.subr.mxu0 0.0
        %1557 = vmatpush1.msra.mxu0 0.0
        %1558 = vmatprep.subr.mxu0 0.0
        %1559 = vmatpush1.msra.mxu0 0.0
        %1560 = vmatprep.subr.mxu0 0.0
        %1561 = vmatpush1.msra.mxu0 0.0
        %1562 = vmatprep.subr.mxu0 0.0
        %v1563 = vand.u32 %v1520, 4294901760
        %1564 = vmatpush1.msra.mxu0 %v1563
        %1565 = vmatprep.subr.mxu0 0.0
        %1566 = vmatpush2.msra.mxu0 0.0
        %1567 = vmatprep.subr.mxu0 0.0
        %1568 = vmatpush2.msra.mxu0 0.0
        %1569 = vmatprep.subr.mxu0 0.0
        %1570 = vmatpush2.msra.mxu0 0.0
        %1571 = vmatprep.subr.mxu0 0.0
        %1572 = vmatpush2.msra.mxu0 0.0
        %1573 = vmatprep.subr.mxu0 0.0
        %1574 = vmatpush2.msra.mxu0 0.0
        %1575 = vmatprep.subr.mxu0 0.0
        %1576 = vmatpush2.msra.mxu0 0.0
        %1577 = vmatprep.subr.mxu0 0.0
        %1578 = vmatpush2.msra.mxu0 0.0
        %1579 = vmatprep.subr.mxu0 0.0
        %1580 = vmatpush2.msra.mxu0 0.0
        %1581 = vmatprep.subr.mxu0 0.0
        %1582 = vmatpush2.msra.mxu0 0.0
        %1583 = vmatprep.subr.mxu0 0.0
        %1584 = vmatpush2.msra.mxu0 0.0
        %1585 = vmatprep.subr.mxu0 0.0
        %1586 = vmatpush2.msra.mxu0 0.0
        %1587 = vmatprep.subr.mxu0 0.0
        %1588 = vmatpush2.msra.mxu0 0.0
        %1589 = vmatprep.subr.mxu0 0.0
        %1590 = vmatpush2.msra.mxu0 0.0
        %1591 = vmatprep.subr.mxu0 0.0
        %1592 = vmatpush2.msra.mxu0 0.0
        %1593 = vmatprep.subr.mxu0 0.0
        %1594 = vmatpush2.msra.mxu0 0.0
        %1595 = vmatprep.subr.mxu0 0.0
        %1596 = vmatpush2.msra.mxu0 0.0
        %1597 = vmatprep.mubr.f32.mxu0 0.0
        %v1598 = vand.u32 %v1530, 4294901760
        %v1599 = vsub.f32 %v1530, %v1598
        %v1600 = vand.u32 %v1599, 4294901760
        %v1601 = vsub.f32 %v1599, %v1600
        %v1602 = vand.u32 %v1601, 4294901760
        %1603 = vmatmul.mubr.f32.gmra.mxu0 %v1602
        %v1604 = vpop.f32.mrf.mxu0
        %v1605 = vadd.f32 %v1526, %v1604
        %v1606 = vpop.f32.mrf.mxu0
        %1607 = vdwg.mxu0
        %1608 = vmatprep.subr.mxu0 0.0
        %1609 = vmatpush1.msra.mxu0 0.0
        %1610 = vmatprep.subr.mxu0 0.0
        %1611 = vmatpush1.msra.mxu0 0.0
        %1612 = vmatprep.subr.mxu0 0.0
        %1613 = vmatpush1.msra.mxu0 0.0
        %1614 = vmatprep.subr.mxu0 0.0
        %1615 = vmatpush1.msra.mxu0 0.0
        %1616 = vmatprep.subr.mxu0 0.0
        %1617 = vmatpush1.msra.mxu0 0.0
        %1618 = vmatprep.subr.mxu0 0.0
        %1619 = vmatpush1.msra.mxu0 0.0
        %1620 = vmatprep.subr.mxu0 0.0
        %1621 = vmatpush1.msra.mxu0 0.0
        %1622 = vmatprep.subr.mxu0 0.0
        %1623 = vmatpush1.msra.mxu0 0.0
        %1624 = vmatprep.subr.mxu0 0.0
        %1625 = vmatpush1.msra.mxu0 0.0
        %1626 = vmatprep.subr.mxu0 0.0
        %1627 = vmatpush1.msra.mxu0 0.0
        %1628 = vmatprep.subr.mxu0 0.0
        %1629 = vmatpush1.msra.mxu0 0.0
        %1630 = vmatprep.subr.mxu0 0.0
        %1631 = vmatpush1.msra.mxu0 0.0
        %1632 = vmatprep.subr.mxu0 0.0
        %1633 = vmatpush1.msra.mxu0 0.0
        %1634 = vmatprep.subr.mxu0 0.0
        %1635 = vmatpush1.msra.mxu0 0.0
        %1636 = vmatprep.subr.mxu0 0.0
        %1637 = vmatpush1.msra.mxu0 0.0
        %1638 = vmatprep.subr.mxu0 0.0
        %v1639 = vand.u32 %v1520, 4294901760
        %v1640 = vsub.f32 %v1520, %v1639
        %v1641 = vand.u32 %v1640, 4294901760
        %v1642 = vsub.f32 %v1640, %v1641
        %v1643 = vand.u32 %v1642, 4294901760
        %1644 = vmatpush1.msra.mxu0 %v1643
        %1645 = vmatprep.subr.mxu0 0.0
        %1646 = vmatpush2.msra.mxu0 0.0
        %1647 = vmatprep.subr.mxu0 0.0
        %1648 = vmatpush2.msra.mxu0 0.0
        %1649 = vmatprep.subr.mxu0 0.0
        %1650 = vmatpush2.msra.mxu0 0.0
        %1651 = vmatprep.subr.mxu0 0.0
        %1652 = vmatpush2.msra.mxu0 0.0
        %1653 = vmatprep.subr.mxu0 0.0
        %1654 = vmatpush2.msra.mxu0 0.0
        %1655 = vmatprep.subr.mxu0 0.0
        %1656 = vmatpush2.msra.mxu0 0.0
        %1657 = vmatprep.subr.mxu0 0.0
        %1658 = vmatpush2.msra.mxu0 0.0
        %1659 = vmatprep.subr.mxu0 0.0
        %1660 = vmatpush2.msra.mxu0 0.0
        %1661 = vmatprep.subr.mxu0 0.0
        %1662 = vmatpush2.msra.mxu0 0.0
        %1663 = vmatprep.subr.mxu0 0.0
        %1664 = vmatpush2.msra.mxu0 0.0
        %1665 = vmatprep.subr.mxu0 0.0
        %1666 = vmatpush2.msra.mxu0 0.0
        %1667 = vmatprep.subr.mxu0 0.0
        %1668 = vmatpush2.msra.mxu0 0.0
        %1669 = vmatprep.subr.mxu0 0.0
        %1670 = vmatpush2.msra.mxu0 0.0
        %1671 = vmatprep.subr.mxu0 0.0
        %1672 = vmatpush2.msra.mxu0 0.0
        %1673 = vmatprep.subr.mxu0 0.0
        %1674 = vmatpush2.msra.mxu0 0.0
        %1675 = vmatprep.subr.mxu0 0.0
        %1676 = vmatpush2.msra.mxu0 0.0
        %1677 = vmatprep.mubr.f32.mxu0 0.0
        %v1678 = vand.u32 %v1530, 4294901760
        %1679 = vmatmul.mubr.f32.gmra.mxu0 %v1678
        %v1680 = vpop.f32.mrf.mxu0
        %v1681 = vadd.f32 %v1605, %v1680
        %v1682 = vpop.f32.mrf.mxu0
        %1683 = vdwg.mxu0
        %1684 = vmatprep.subr.mxu0 0.0
        %1685 = vmatpush1.msra.mxu0 0.0
        %1686 = vmatprep.subr.mxu0 0.0
        %1687 = vmatpush1.msra.mxu0 0.0
        %1688 = vmatprep.subr.mxu0 0.0
        %1689 = vmatpush1.msra.mxu0 0.0
        %1690 = vmatprep.subr.mxu0 0.0
        %1691 = vmatpush1.msra.mxu0 0.0
        %1692 = vmatprep.subr.mxu0 0.0
        %1693 = vmatpush1.msra.mxu0 0.0
        %1694 = vmatprep.subr.mxu0 0.0
        %1695 = vmatpush1.msra.mxu0 0.0
        %1696 = vmatprep.subr.mxu0 0.0
        %1697 = vmatpush1.msra.mxu0 0.0
        %1698 = vmatprep.subr.mxu0 0.0
        %1699 = vmatpush1.msra.mxu0 0.0
        %1700 = vmatprep.subr.mxu0 0.0
        %1701 = vmatpush1.msra.mxu0 0.0
        %1702 = vmatprep.subr.mxu0 0.0
        %1703 = vmatpush1.msra.mxu0 0.0
        %1704 = vmatprep.subr.mxu0 0.0
        %1705 = vmatpush1.msra.mxu0 0.0
        %1706 = vmatprep.subr.mxu0 0.0
        %1707 = vmatpush1.msra.mxu0 0.0
        %1708 = vmatprep.subr.mxu0 0.0
        %1709 = vmatpush1.msra.mxu0 0.0
        %1710 = vmatprep.subr.mxu0 0.0
        %1711 = vmatpush1.msra.mxu0 0.0
        %1712 = vmatprep.subr.mxu0 0.0
        %1713 = vmatpush1.msra.mxu0 0.0
        %1714 = vmatprep.subr.mxu0 0.0
        %v1715 = vand.u32 %v1520, 4294901760
        %v1716 = vsub.f32 %v1520, %v1715
        %1717 = vmatpush1.msra.mxu0 %v1716
        %1718 = vmatprep.subr.mxu0 0.0
        %1719 = vmatpush2.msra.mxu0 0.0
        %1720 = vmatprep.subr.mxu0 0.0
        %1721 = vmatpush2.msra.mxu0 0.0
        %1722 = vmatprep.subr.mxu0 0.0
        %1723 = vmatpush2.msra.mxu0 0.0
        %1724 = vmatprep.subr.mxu0 0.0
        %1725 = vmatpush2.msra.mxu0 0.0
        %1726 = vmatprep.subr.mxu0 0.0
        %1727 = vmatpush2.msra.mxu0 0.0
        %1728 = vmatprep.subr.mxu0 0.0
        %1729 = vmatpush2.msra.mxu0 0.0
        %1730 = vmatprep.subr.mxu0 0.0
        %1731 = vmatpush2.msra.mxu0 0.0
        %1732 = vmatprep.subr.mxu0 0.0
        %1733 = vmatpush2.msra.mxu0 0.0
        %1734 = vmatprep.subr.mxu0 0.0
        %1735 = vmatpush2.msra.mxu0 0.0
        %1736 = vmatprep.subr.mxu0 0.0
        %1737 = vmatpush2.msra.mxu0 0.0
        %1738 = vmatprep.subr.mxu0 0.0
        %1739 = vmatpush2.msra.mxu0 0.0
        %1740 = vmatprep.subr.mxu0 0.0
        %1741 = vmatpush2.msra.mxu0 0.0
        %1742 = vmatprep.subr.mxu0 0.0
        %1743 = vmatpush2.msra.mxu0 0.0
        %1744 = vmatprep.subr.mxu0 0.0
        %1745 = vmatpush2.msra.mxu0 0.0
        %1746 = vmatprep.subr.mxu0 0.0
        %1747 = vmatpush2.msra.mxu0 0.0
        %1748 = vmatprep.subr.mxu0 0.0
        %1749 = vmatpush2.msra.mxu0 0.0
        %1750 = vmatprep.mubr.f32.mxu0 0.0
        %v1751 = vand.u32 %v1530, 4294901760
        %v1752 = vsub.f32 %v1530, %v1751
        %1753 = vmatmul.mubr.f32.gmra.mxu0 %v1752
        %v1754 = vpop.f32.mrf.mxu0
        %v1755 = vadd.f32 %v1681, %v1754
        %v1756 = vpop.f32.mrf.mxu0
        %1757 = vdwg.mxu0
        %1758 = vmatprep.subr.mxu0 0.0
        %1759 = vmatpush1.msra.mxu0 0.0
        %1760 = vmatprep.subr.mxu0 0.0
        %1761 = vmatpush1.msra.mxu0 0.0
        %1762 = vmatprep.subr.mxu0 0.0
        %1763 = vmatpush1.msra.mxu0 0.0
        %1764 = vmatprep.subr.mxu0 0.0
        %1765 = vmatpush1.msra.mxu0 0.0
        %1766 = vmatprep.subr.mxu0 0.0
        %1767 = vmatpush1.msra.mxu0 0.0
        %1768 = vmatprep.subr.mxu0 0.0
        %1769 = vmatpush1.msra.mxu0 0.0
        %1770 = vmatprep.subr.mxu0 0.0
        %1771 = vmatpush1.msra.mxu0 0.0
        %1772 = vmatprep.subr.mxu0 0.0
        %1773 = vmatpush1.msra.mxu0 0.0
        %1774 = vmatprep.subr.mxu0 0.0
        %1775 = vmatpush1.msra.mxu0 0.0
        %1776 = vmatprep.subr.mxu0 0.0
        %1777 = vmatpush1.msra.mxu0 0.0
        %1778 = vmatprep.subr.mxu0 0.0
        %1779 = vmatpush1.msra.mxu0 0.0
        %1780 = vmatprep.subr.mxu0 0.0
        %1781 = vmatpush1.msra.mxu0 0.0
        %1782 = vmatprep.subr.mxu0 0.0
        %1783 = vmatpush1.msra.mxu0 0.0
        %1784 = vmatprep.subr.mxu0 0.0
        %1785 = vmatpush1.msra.mxu0 0.0
        %1786 = vmatprep.subr.mxu0 0.0
        %1787 = vmatpush1.msra.mxu0 0.0
        %1788 = vmatprep.subr.mxu0 0.0
        %v1789 = vand.u32 %v1520, 4294901760
        %1790 = vmatpush1.msra.mxu0 %v1789
        %1791 = vmatprep.subr.mxu0 0.0
        %1792 = vmatpush2.msra.mxu0 0.0
        %1793 = vmatprep.subr.mxu0 0.0
        %1794 = vmatpush2.msra.mxu0 0.0
        %1795 = vmatprep.subr.mxu0 0.0
        %1796 = vmatpush2.msra.mxu0 0.0
        %1797 = vmatprep.subr.mxu0 0.0
        %1798 = vmatpush2.msra.mxu0 0.0
        %1799 = vmatprep.subr.mxu0 0.0
        %1800 = vmatpush2.msra.mxu0 0.0
        %1801 = vmatprep.subr.mxu0 0.0
        %1802 = vmatpush2.msra.mxu0 0.0
        %1803 = vmatprep.subr.mxu0 0.0
        %1804 = vmatpush2.msra.mxu0 0.0
        %1805 = vmatprep.subr.mxu0 0.0
        %1806 = vmatpush2.msra.mxu0 0.0
        %1807 = vmatprep.subr.mxu0 0.0
        %1808 = vmatpush2.msra.mxu0 0.0
        %1809 = vmatprep.subr.mxu0 0.0
        %1810 = vmatpush2.msra.mxu0 0.0
        %1811 = vmatprep.subr.mxu0 0.0
        %1812 = vmatpush2.msra.mxu0 0.0
        %1813 = vmatprep.subr.mxu0 0.0
        %1814 = vmatpush2.msra.mxu0 0.0
        %1815 = vmatprep.subr.mxu0 0.0
        %1816 = vmatpush2.msra.mxu0 0.0
        %1817 = vmatprep.subr.mxu0 0.0
        %1818 = vmatpush2.msra.mxu0 0.0
        %1819 = vmatprep.subr.mxu0 0.0
        %1820 = vmatpush2.msra.mxu0 0.0
        %1821 = vmatprep.subr.mxu0 0.0
        %1822 = vmatpush2.msra.mxu0 0.0
        %1823 = vmatprep.mubr.f32.mxu0 0.0
        %v1824 = vand.u32 %v1530, 4294901760
        %v1825 = vsub.f32 %v1530, %v1824
        %v1826 = vand.u32 %v1825, 4294901760
        %1827 = vmatmul.mubr.f32.gmra.mxu0 %v1826
        %v1828 = vpop.f32.mrf.mxu0
        %v1829 = vadd.f32 %v1755, %v1828
        %v1830 = vpop.f32.mrf.mxu0
        %1831 = vdwg.mxu0
        %1832 = vmatprep.subr.mxu0 0.0
        %1833 = vmatpush1.msra.mxu0 0.0
        %1834 = vmatprep.subr.mxu0 0.0
        %1835 = vmatpush1.msra.mxu0 0.0
        %1836 = vmatprep.subr.mxu0 0.0
        %1837 = vmatpush1.msra.mxu0 0.0
        %1838 = vmatprep.subr.mxu0 0.0
        %1839 = vmatpush1.msra.mxu0 0.0
        %1840 = vmatprep.subr.mxu0 0.0
        %1841 = vmatpush1.msra.mxu0 0.0
        %1842 = vmatprep.subr.mxu0 0.0
        %1843 = vmatpush1.msra.mxu0 0.0
        %1844 = vmatprep.subr.mxu0 0.0
        %1845 = vmatpush1.msra.mxu0 0.0
        %1846 = vmatprep.subr.mxu0 0.0
        %1847 = vmatpush1.msra.mxu0 0.0
        %1848 = vmatprep.subr.mxu0 0.0
        %1849 = vmatpush1.msra.mxu0 0.0
        %1850 = vmatprep.subr.mxu0 0.0
        %1851 = vmatpush1.msra.mxu0 0.0
        %1852 = vmatprep.subr.mxu0 0.0
        %1853 = vmatpush1.msra.mxu0 0.0
        %1854 = vmatprep.subr.mxu0 0.0
        %1855 = vmatpush1.msra.mxu0 0.0
        %1856 = vmatprep.subr.mxu0 0.0
        %1857 = vmatpush1.msra.mxu0 0.0
        %1858 = vmatprep.subr.mxu0 0.0
        %1859 = vmatpush1.msra.mxu0 0.0
        %1860 = vmatprep.subr.mxu0 0.0
        %1861 = vmatpush1.msra.mxu0 0.0
        %1862 = vmatprep.subr.mxu0 0.0
        %v1863 = vand.u32 %v1520, 4294901760
        %v1864 = vsub.f32 %v1520, %v1863
        %v1865 = vand.u32 %v1864, 4294901760
        %1866 = vmatpush1.msra.mxu0 %v1865
        %1867 = vmatprep.subr.mxu0 0.0
        %1868 = vmatpush2.msra.mxu0 0.0
        %1869 = vmatprep.subr.mxu0 0.0
        %1870 = vmatpush2.msra.mxu0 0.0
        %1871 = vmatprep.subr.mxu0 0.0
        %1872 = vmatpush2.msra.mxu0 0.0
        %1873 = vmatprep.subr.mxu0 0.0
        %1874 = vmatpush2.msra.mxu0 0.0
        %1875 = vmatprep.subr.mxu0 0.0
        %1876 = vmatpush2.msra.mxu0 0.0
        %1877 = vmatprep.subr.mxu0 0.0
        %1878 = vmatpush2.msra.mxu0 0.0
        %1879 = vmatprep.subr.mxu0 0.0
        %1880 = vmatpush2.msra.mxu0 0.0
        %1881 = vmatprep.subr.mxu0 0.0
        %1882 = vmatpush2.msra.mxu0 0.0
        %1883 = vmatprep.subr.mxu0 0.0
        %1884 = vmatpush2.msra.mxu0 0.0
        %1885 = vmatprep.subr.mxu0 0.0
        %1886 = vmatpush2.msra.mxu0 0.0
        %1887 = vmatprep.subr.mxu0 0.0
        %1888 = vmatpush2.msra.mxu0 0.0
        %1889 = vmatprep.subr.mxu0 0.0
        %1890 = vmatpush2.msra.mxu0 0.0
        %1891 = vmatprep.subr.mxu0 0.0
        %1892 = vmatpush2.msra.mxu0 0.0
        %1893 = vmatprep.subr.mxu0 0.0
        %1894 = vmatpush2.msra.mxu0 0.0
        %1895 = vmatprep.subr.mxu0 0.0
        %1896 = vmatpush2.msra.mxu0 0.0
        %1897 = vmatprep.subr.mxu0 0.0
        %1898 = vmatpush2.msra.mxu0 0.0
        %1899 = vmatprep.mubr.f32.mxu0 0.0
        %v1900 = vand.u32 %v1530, 4294901760
        %1901 = vmatmul.mubr.f32.gmra.mxu0 %v1900
        %v1902 = vpop.f32.mrf.mxu0
        %v1903 = vadd.f32 %v1829, %v1902
        %v1904 = vpop.f32.mrf.mxu0
        %1905 = vdwg.mxu0
        %1906 = vmatprep.subr.mxu0 0.0
        %1907 = vmatpush1.msra.mxu0 0.0
        %1908 = vmatprep.subr.mxu0 0.0
        %1909 = vmatpush1.msra.mxu0 0.0
        %1910 = vmatprep.subr.mxu0 0.0
        %1911 = vmatpush1.msra.mxu0 0.0
        %1912 = vmatprep.subr.mxu0 0.0
        %1913 = vmatpush1.msra.mxu0 0.0
        %1914 = vmatprep.subr.mxu0 0.0
        %1915 = vmatpush1.msra.mxu0 0.0
        %1916 = vmatprep.subr.mxu0 0.0
        %1917 = vmatpush1.msra.mxu0 0.0
        %1918 = vmatprep.subr.mxu0 0.0
        %1919 = vmatpush1.msra.mxu0 0.0
        %1920 = vmatprep.subr.mxu0 0.0
        %1921 = vmatpush1.msra.mxu0 0.0
        %1922 = vmatprep.subr.mxu0 0.0
        %1923 = vmatpush1.msra.mxu0 0.0
        %1924 = vmatprep.subr.mxu0 0.0
        %1925 = vmatpush1.msra.mxu0 0.0
        %1926 = vmatprep.subr.mxu0 0.0
        %1927 = vmatpush1.msra.mxu0 0.0
        %1928 = vmatprep.subr.mxu0 0.0
        %1929 = vmatpush1.msra.mxu0 0.0
        %1930 = vmatprep.subr.mxu0 0.0
        %1931 = vmatpush1.msra.mxu0 0.0
        %1932 = vmatprep.subr.mxu0 0.0
        %1933 = vmatpush1.msra.mxu0 0.0
        %1934 = vmatprep.subr.mxu0 0.0
        %1935 = vmatpush1.msra.mxu0 0.0
        %1936 = vmatprep.subr.mxu0 0.0
        %v1937 = vand.u32 %v1520, 4294901760
        %1938 = vmatpush1.msra.mxu0 %v1937
        %1939 = vmatprep.subr.mxu0 0.0
        %1940 = vmatpush2.msra.mxu0 0.0
        %1941 = vmatprep.subr.mxu0 0.0
        %1942 = vmatpush2.msra.mxu0 0.0
        %1943 = vmatprep.subr.mxu0 0.0
        %1944 = vmatpush2.msra.mxu0 0.0
        %1945 = vmatprep.subr.mxu0 0.0
        %1946 = vmatpush2.msra.mxu0 0.0
        %1947 = vmatprep.subr.mxu0 0.0
        %1948 = vmatpush2.msra.mxu0 0.0
        %1949 = vmatprep.subr.mxu0 0.0
        %1950 = vmatpush2.msra.mxu0 0.0
        %1951 = vmatprep.subr.mxu0 0.0
        %1952 = vmatpush2.msra.mxu0 0.0
        %1953 = vmatprep.subr.mxu0 0.0
        %1954 = vmatpush2.msra.mxu0 0.0
        %1955 = vmatprep.subr.mxu0 0.0
        %1956 = vmatpush2.msra.mxu0 0.0
        %1957 = vmatprep.subr.mxu0 0.0
        %1958 = vmatpush2.msra.mxu0 0.0
        %1959 = vmatprep.subr.mxu0 0.0
        %1960 = vmatpush2.msra.mxu0 0.0
        %1961 = vmatprep.subr.mxu0 0.0
        %1962 = vmatpush2.msra.mxu0 0.0
        %1963 = vmatprep.subr.mxu0 0.0
        %1964 = vmatpush2.msra.mxu0 0.0
        %1965 = vmatprep.subr.mxu0 0.0
        %1966 = vmatpush2.msra.mxu0 0.0
        %1967 = vmatprep.subr.mxu0 0.0
        %1968 = vmatpush2.msra.mxu0 0.0
        %1969 = vmatprep.subr.mxu0 0.0
        %1970 = vmatpush2.msra.mxu0 0.0
        %1971 = vmatprep.mubr.f32.mxu0 0.0
        %v1972 = vand.u32 %v1530, 4294901760
        %1973 = vmatmul.mubr.f32.gmra.mxu0 %v1972
        %v1974 = vpop.f32.mrf.mxu0
        %v1975 = vadd.f32 %v1903, %v1974
        %v1976 = vpop.f32.mrf.mxu0
        %1977 = vdwg.mxu0
        %v1978 = vmax.f32 %v1975, 0.0
        %v1980 = vrot.slane %v1978, 1
        %v1982 = vsub.f32 %v1978, %v1980
        %v1983 = vsub.f32 0.0, %v1982
        %v1984 = vmul.f32 %v1983, 1.442695
        %v1985 = vpow.pop %v1984
        %v1986 = vadd.f32 %v1985, 1.0
        %v1987 = vrcp.pop %v1986
        %v1988 = vmul.f32 1.0, %v1987
        %v1989 = vsub.f32 1.0, %v1988
        %v1991 = vrot.slane %v1989, 7
        %vm1993 = vcmask 1040384
        %v1994 = vsel %vm1993, %v1988, %v1991
        %1995 = vst [vmem:[%s272] sm:$0x3] %v1994
        %s1996 = sand.u32 %s181, 1
        %s1997 = scalar_lea.sflag [#allocation3], %s1996
        %s1998 = sand.u32 %s181, 1
        %s1999 = smul.addr %s1998, 2
        %s2000 = scalar_lea.vmem [#allocation2], %s1999
        // Predicated region
        $region49: #{tpu_custom_call.1} parent=47 // pred_check
          %p2001 = pneg %p191
        $region50: #{tpu_custom_call.1} parent=47 // pred_check_branch
          %2003 = sbr.rel (%p2001) target = $region52
        $region51: #{tpu_custom_call.1} parent=47 // pred_region
          %s2005 = ssub.s32 32, 32
          %2006 = vsyncadd %s1997, %s2005
          %s2007 = smul.addr %s21, 32
          %s2008 = scalar_lea.hbm %s7, %s2007
          %s2010 = sshll.u32 %s2000, 4
          %s2011 = int_to_ptr.vmem [resolvable:$true] %s2010
          %2013 = dma.vmem_to_hbm [thread:$0]  %s2011, 32, %s2008, %s1997
        $region52: #{tpu_custom_call.1} parent=47 // pred_fallthru
          _
      $region48: #{tpu_custom_call.1} parent=5 // pred_fallthru
        _
      %p2014 = scmp.le.s32.totalorder 2, %s16
      // Predicated region
      $region53: #{tpu_custom_call.1} parent=5 // pred_check
        %p2015 = pneg %p2014
      $region54: #{tpu_custom_call.1} parent=5 // pred_check_branch
        %2017 = sbr.rel (%p2015) target = $region56
      $region55: #{tpu_custom_call.1} parent=5 // pred_region
        %s2018 = ssub.s32 %s16, 2
        // Predicated region
        $region57: #{tpu_custom_call.1} parent=55 // pred_check
          %p2019 = pneg %p197
        $region58: #{tpu_custom_call.1} parent=55 // pred_check_branch
          %2021 = sbr.rel (%p2019) target = $region60
        $region59: #{tpu_custom_call.1} parent=55 // pred_region
          %s2022 = sand.u32 %s182, 1
          %s2023 = scalar_lea.sflag [#allocation3], %s2022
          %s2024 = sand.u32 %s182, 1
          %s2025 = smul.addr %s2024, 2
          %s2026 = scalar_lea.vmem [#allocation2], %s2025
          %2027 = dma.done %s2023, 32
        $region60: #{tpu_custom_call.1} parent=55 // pred_fallthru
          _
      $region56: #{tpu_custom_call.1} parent=5 // pred_fallthru
        _
    $region6: #{tpu_custom_call.1} parent=1 // loop_footer
      %s20 = sadd.s32 1, %s16
    $region7: #{tpu_custom_call.1} parent=1 // loop_footer_branch
      %15 = sbr.rel target = $region3
    $region8: #{tpu_custom_call.1} parent=1 // loop_exit
      _
    %2028 = vsyncpa [#allocation3], 1
    %s2029 = scalar_lea.sflag [#allocation3], 1
    %2030 = vsyncpa %s2029, 1

</llo_original>
